<compile_context>
chip_gen: v5e
topology: v5e:2x2
jax: 0.10.0
libtpu: 0.0.40
codegen_flags: <defaults>
</compile_context>

<pallas_src>
import jax
import jax.numpy as jnp
from jax.experimental import pallas as pl
from jax.experimental.pallas import tpu as pltpu


def _lstm_gates_to_hc(gates, c_prev, hs):
    """LSTM nonlinearities. Gate columns are pre-ordered (i, f, o, g)."""
    sig = jax.nn.sigmoid(gates[:, :3 * hs])      # one EUP pass for i, f, o
    g = jnp.tanh(gates[:, 3 * hs:])              # one EUP pass for g
    i = sig[:, 0 * hs:1 * hs]
    f = sig[:, 1 * hs:2 * hs]
    o = sig[:, 2 * hs:3 * hs]
    c_new = f * c_prev + i * g
    h_new = o * jnp.tanh(c_new)
    return h_new, c_new


def _output_selection(T, C):
    """Static (column -> (decoder step, channel)) mapping implied by
    stack(reversed(hd_list), 1).view(B, C, T)[:, :, -1]."""
    sel = []
    for ci in range(C):
        j = ci * T + (T - 1)      # flat index into the per-batch (T*C) buffer
        t_rev = j // C            # time index after the reversal
        ch = j % C
        step = T - 1 - t_rev      # original decoder step that produced it
        sel.append((step, ch))
    return sel


def lstm_vae_kernel(x_ref, eps_ref,
                    wih_e_ref, whh_e_ref, b_e_ref,
                    wmv_ref, bmv_ref,
                    we2d_ref, be2d_ref,
                    whh_d_ref, b_d0_ref,
                    wdec_ref, bdec_ref,
                    out_ref):
    B, T, C = x_ref.shape
    H = eps_ref.shape[1]

    # ---------------- encoder LSTM (RNNModel) ----------------
    # Input projection hoisted off the serial chain: one matmul with the fused
    # (b_ih + b_hh) bias folded in.
    xp = (jnp.dot(x_ref[...].reshape(B * T, C), wih_e_ref[...],
                  preferred_element_type=jnp.float32)
          + b_e_ref[...]).reshape(B, T, 4 * H)

    whh_e = whh_e_ref[...]
    h = jnp.zeros((B, H), jnp.float32)
    c = jnp.zeros((B, H), jnp.float32)
    for t in range(T):                                   # static -> unrolled
        gates = xp[:, t, :] + jnp.dot(h, whh_e,
                                      preferred_element_type=jnp.float32)
        h, c = _lstm_gates_to_hc(gates, c, H)

    # ---------------- variational head ----------------
    # mean and log_var share one (H, 2H) matmul.
    mv = jnp.dot(h, wmv_ref[...], preferred_element_type=jnp.float32) + bmv_ref[...]
    mean = mv[:, :H]
    log_var = mv[:, H:]
    z = mean + jnp.exp(0.5 * log_var) * eps_ref[...]     # == sqrt(exp(lv)) * eps
    # encoder_to_decoder: Linear(H -> C)
    z = jnp.dot(z, we2d_ref[...], preferred_element_type=jnp.float32) + be2d_ref[...]

    # ---------------- decoder (Sequence2SequenceDecoder) ----------------
    # hidden_to_input folded into the cell:
    #   gates_i = hd_{i-1} @ (wh2i^T @ wih_d^T + whh_d^T) + (bh2i @ wih_d^T + b)
    # Step 0 special case: decoder input starts at zero, hidden = z.
    wdec = wdec_ref[...]
    bdec = bdec_ref[...]

    sel = _output_selection(T, C)
    needed_steps = {s for s, _ in sel}
    kept = {}                                            # step -> hd (only needed ones)

    gates0 = (jnp.dot(z, whh_d_ref[...], preferred_element_type=jnp.float32)
              + b_d0_ref[...])
    hd, cd = _lstm_gates_to_hc(gates0, jnp.zeros((B, C), jnp.float32), C)
    if 0 in needed_steps:
        kept[0] = hd
    for step in range(1, T):
        gates = jnp.dot(hd, wdec, preferred_element_type=jnp.float32) + bdec
        hd, cd = _lstm_gates_to_hc(gates, cd, C)
        if step in needed_steps:
            kept[step] = hd

    # ---------------- output selection ----------------
    # PyTorch: stack(reversed(hd_list), 1).view(B, C, T)[:, :, -1]
    # (row-major reinterpretation).  Emit only those B*C elements.
    cols = [kept[step][:, ch:ch + 1] for step, ch in sel]
    out_ref[...] = jnp.concatenate(cols, axis=1).astype(out_ref.dtype)


def init_params(key, input_size, hidden_size):
    """Deterministic synthetic parameters with PyTorch-native shapes."""
    C, H = input_size, hidden_size
    ks = jax.random.split(key, 16)

    def u(k, shape, fan):
        b = 1.0 / float(fan) ** 0.5
        return jax.random.uniform(k, shape, jnp.float32, -b, b)

    p = {}
    # encoder LSTMCell(input=C, hidden=H); PyTorch gate row order (i, f, g, o)
    p["wih_e"] = u(ks[0], (4 * H, C), H)
    p["whh_e"] = u(ks[1], (4 * H, H), H)
    p["bih_e"] = u(ks[2], (4 * H,), H)
    p["bhh_e"] = u(ks[3], (4 * H,), H)
    # mean / log_var: Linear(H, H)
    p["wm"] = u(ks[4], (H, H), H)
    p["bm"] = u(ks[5], (H,), H)
    p["wlv"] = u(ks[6], (H, H), H)
    p["blv"] = u(ks[7], (H,), H)
    # encoder_to_decoder: Linear(H, C)
    p["we2d"] = u(ks[8], (C, H), H)
    p["be2d"] = u(ks[9], (C,), H)
    # decoder.hidden_to_input: Linear(C, H)
    p["wh2i"] = u(ks[10], (H, C), C)
    p["bh2i"] = u(ks[11], (H,), C)
    # decoder LSTMCell(input=H, hidden=C)
    p["wih_d"] = u(ks[12], (4 * C, H), C)
    p["whh_d"] = u(ks[13], (4 * C, C), C)
    p["bih_d"] = u(ks[14], (4 * C,), C)
    p["bhh_d"] = u(ks[15], (4 * C,), C)
    return p


def _reorder_gates(w):
    """PyTorch LSTM gate blocks (i, f, g, o) -> (i, f, o, g) along axis 0."""
    i, f, g, o = jnp.split(w, 4, axis=0)
    return jnp.concatenate([i, f, o, g], axis=0)


def prepare_params(p):
    """One-time weight prep so the kernel receives layout-ready constants:
    (in, 4*hs) transposed weights, reordered gates, fused biases, fused
    mean/log_var matmul, and hidden_to_input folded into the decoder cell."""
    ro = _reorder_gates

    wih_e = ro(p["wih_e"]).T                                     # (C, 4H)
    whh_e = ro(p["whh_e"]).T                                     # (H, 4H)
    b_e = (ro(p["bih_e"]) + ro(p["bhh_e"]))[None, :]             # (1, 4H)

    wmv = jnp.concatenate([p["wm"].T, p["wlv"].T], axis=1)       # (H, 2H)
    bmv = jnp.concatenate([p["bm"], p["blv"]], axis=0)[None, :]  # (1, 2H)

    we2d = p["we2d"].T                                           # (H, C)
    be2d = p["be2d"][None, :]                                    # (1, C)

    wih_d = ro(p["wih_d"]).T                                     # (H, 4C)
    whh_d = ro(p["whh_d"]).T                                     # (C, 4C)
    b_d0 = (ro(p["bih_d"]) + ro(p["bhh_d"]))[None, :]            # (1, 4C)
    wdec = p["wh2i"].T @ wih_d + whh_d                           # (C, 4C)
    bdec = p["bh2i"][None, :] @ wih_d + b_d0                     # (1, 4C)

    return dict(wih_e=wih_e, whh_e=whh_e, b_e=b_e,
                wmv=wmv, bmv=bmv, we2d=we2d, be2d=be2d,
                whh_d=whh_d, b_d0=b_d0, wdec=wdec, bdec=bdec)


@jax.jit
def lstm_vae_forward(x_bct, eps, prep):
    """x_bct: (B, C, T); eps: (B, H) reparameterization noise."""
    B, C, T = x_bct.shape
    x = x_bct.reshape(B, T, C).astype(jnp.float32)   # == torch .view(-1, T, c)

    args = (x, eps.astype(jnp.float32),
            prep["wih_e"], prep["whh_e"], prep["b_e"],
            prep["wmv"], prep["bmv"],
            prep["we2d"], prep["be2d"],
            prep["whh_d"], prep["b_d0"],
            prep["wdec"], prep["bdec"])

    vmem = pl.BlockSpec(memory_space=pltpu.MemorySpace.VMEM)
    # Whole problem is <100 KiB -> fully VMEM-resident, no grid needed.
    # TODO(synk): if B scales up, add a leading grid axis over B with
    # dimension_semantics=("parallel",) so both v7x TensorCores are used.
    return pl.pallas_call(
        lstm_vae_kernel,
        out_shape=jax.ShapeDtypeStruct((B, C), jnp.float32),
        in_specs=[vmem] * len(args),
        out_specs=vmem,
    )(*args)


def reference_forward(x_bct, eps, p):
    """Pure-JAX transcription of the PyTorch module (validation only)."""
    B, C, T = x_bct.shape
    H = eps.shape[1]
    x = x_bct.reshape(B, T, C).astype(jnp.float32)

    def cell(inp, h, c, wih, whh, bih, bhh):
        hs = h.shape[1]
        g = inp @ wih.T + bih + h @ whh.T + bhh
        i = jax.nn.sigmoid(g[:, 0 * hs:1 * hs])
        f = jax.nn.sigmoid(g[:, 1 * hs:2 * hs])
        gg = jnp.tanh(g[:, 2 * hs:3 * hs])
        o = jax.nn.sigmoid(g[:, 3 * hs:4 * hs])
        c = f * c + i * gg
        h = o * jnp.tanh(c)
        return h, c

    h = jnp.zeros((B, H), jnp.float32)
    c = jnp.zeros((B, H), jnp.float32)
    for t in range(T):
        h, c = cell(x[:, t, :], h, c,
                    p["wih_e"], p["whh_e"], p["bih_e"], p["bhh_e"])

    mean = h @ p["wm"].T + p["bm"]
    log_var = h @ p["wlv"].T + p["blv"]
    z = mean + jnp.sqrt(jnp.exp(log_var)) * eps
    z = z @ p["we2d"].T + p["be2d"]

    hd = z
    cd = jnp.zeros((B, C), jnp.float32)
    inp = jnp.zeros((B, H), jnp.float32)
    outs = []
    for _ in range(T):
        hd, cd = cell(inp, hd, cd,
                      p["wih_d"], p["whh_d"], p["bih_d"], p["bhh_d"])
        inp = hd @ p["wh2i"].T + p["bh2i"]
        outs.append(hd)
    dec = jnp.stack(outs[::-1], axis=1)          # (B, T, C)
    return dec.reshape(B, C, T)[:, :, -1]


if __name__ == "__main__":
    key = jax.random.PRNGKey(0)
    k_x, k_eps, k_p = jax.random.split(key, 3)

    B, C, T, H = 2, 4, 8, 32      # batch, channels(=input_size), seq len, hidden
    x = jax.random.normal(k_x, (B, C, T), jnp.float32)
    eps = jax.random.normal(k_eps, (B, H), jnp.float32)

    params = init_params(k_p, C, H)
    prep = prepare_params(params)

    out = lstm_vae_forward(x, eps, prep)
    jax.block_until_ready(out)
    assert out.shape == (B, C), out.shape

    ref = reference_forward(x, eps, params)
    assert float(jnp.max(jnp.abs(out - ref))) < 1e-3
    print("KERNEL_OK")
</pallas_src>

<mosaic_0001>
module attributes {stable_mosaic.version = 11 : i64} {
  func.func @lstm_vae_kernel(%arg0: memref<2x8x4xf32, #tpu.memory_space<vmem>>, %arg1: memref<2x32xf32, #tpu.memory_space<vmem>>, %arg2: memref<4x128xf32, #tpu.memory_space<vmem>>, %arg3: memref<32x128xf32, #tpu.memory_space<vmem>>, %arg4: memref<1x128xf32, #tpu.memory_space<vmem>>, %arg5: memref<32x64xf32, #tpu.memory_space<vmem>>, %arg6: memref<1x64xf32, #tpu.memory_space<vmem>>, %arg7: memref<32x4xf32, #tpu.memory_space<vmem>>, %arg8: memref<1x4xf32, #tpu.memory_space<vmem>>, %arg9: memref<4x16xf32, #tpu.memory_space<vmem>>, %arg10: memref<1x16xf32, #tpu.memory_space<vmem>>, %arg11: memref<4x16xf32, #tpu.memory_space<vmem>>, %arg12: memref<1x16xf32, #tpu.memory_space<vmem>>, %arg13: memref<2x4xf32, #tpu.memory_space<vmem>>) attributes {dimension_semantics = [], scalar_prefetch = 0 : i64, scratch_operands = 0 : i64, tpu.core_type = #tpu.core_type<tc>} {
    %c0 = arith.constant 0 : index
    %c0_0 = arith.constant 0 : index
    %c0_1 = arith.constant 0 : index
    %0 = vector.load %arg0[%c0, %c0_0, %c0_1] : memref<2x8x4xf32, #tpu.memory_space<vmem>>, vector<2x8x4xf32>
    %1 = vector.shape_cast %0 : vector<2x8x4xf32> to vector<16x4xf32>
    %c0_2 = arith.constant 0 : index
    %c0_3 = arith.constant 0 : index
    %2 = vector.load %arg2[%c0_2, %c0_3] : memref<4x128xf32, #tpu.memory_space<vmem>>, vector<4x128xf32>
    %cst = arith.constant dense<0.000000e+00> : vector<16x128xf32>
    %3 = tpu.matmul %1, %2, %cst {dimension_numbers = #tpu.dot_dimension_numbers<[1], [0], [0], [1], [0, 0, 1, 1], [], []>} : vector<16x4xf32>, vector<4x128xf32>, vector<16x128xf32> -> vector<16x128xf32>
    %c0_4 = arith.constant 0 : index
    %c0_5 = arith.constant 0 : index
    %4 = vector.load %arg4[%c0_4, %c0_5] : memref<1x128xf32, #tpu.memory_space<vmem>>, vector<1x128xf32>
    %5 = vector.broadcast %4 : vector<1x128xf32> to vector<16x128xf32>
    %6 = arith.addf %3, %5 : vector<16x128xf32>
    %7 = vector.shape_cast %6 : vector<16x128xf32> to vector<2x8x128xf32>
    %c0_6 = arith.constant 0 : index
    %c0_7 = arith.constant 0 : index
    %8 = vector.load %arg3[%c0_6, %c0_7] : memref<32x128xf32, #tpu.memory_space<vmem>>, vector<32x128xf32>
    %cst_8 = arith.constant 0.000000e+00 : f32
    %9 = vector.broadcast %cst_8 : f32 to vector<2x32xf32>
    %cst_9 = arith.constant 0.000000e+00 : f32
    %10 = vector.broadcast %cst_9 : f32 to vector<2x32xf32>
    %11 = vector.extract_strided_slice %7 {offsets = [0, 0, 0], sizes = [2, 1, 128], strides = [1, 1, 1]} : vector<2x8x128xf32> to vector<2x1x128xf32>
    %12 = vector.shape_cast %11 : vector<2x1x128xf32> to vector<2x128xf32>
    %cst_10 = arith.constant dense<0.000000e+00> : vector<2x128xf32>
    %13 = tpu.matmul %9, %8, %cst_10 {dimension_numbers = #tpu.dot_dimension_numbers<[1], [0], [0], [1], [0, 0, 1, 1], [], []>} : vector<2x32xf32>, vector<32x128xf32>, vector<2x128xf32> -> vector<2x128xf32>
    %14 = arith.addf %12, %13 : vector<2x128xf32>
    %15 = vector.extract_strided_slice %14 {offsets = [0, 0], sizes = [2, 96], strides = [1, 1]} : vector<2x128xf32> to vector<2x96xf32>
    %16 = arith.negf %15 : vector<2x96xf32>
    %17 = math.exp %16 : vector<2x96xf32>
    %cst_11 = arith.constant 1.000000e+00 : f32
    %18 = vector.broadcast %cst_11 : f32 to vector<2x96xf32>
    %19 = arith.addf %18, %17 : vector<2x96xf32>
    %20 = arith.divf %18, %19 : vector<2x96xf32>
    %21 = vector.extract_strided_slice %14 {offsets = [0, 96], sizes = [2, 32], strides = [1, 1]} : vector<2x128xf32> to vector<2x32xf32>
    %22 = math.tanh %21 : vector<2x32xf32>
    %23 = vector.extract_strided_slice %20 {offsets = [0, 0], sizes = [2, 32], strides = [1, 1]} : vector<2x96xf32> to vector<2x32xf32>
    %24 = vector.extract_strided_slice %20 {offsets = [0, 32], sizes = [2, 32], strides = [1, 1]} : vector<2x96xf32> to vector<2x32xf32>
    %25 = vector.extract_strided_slice %20 {offsets = [0, 64], sizes = [2, 32], strides = [1, 1]} : vector<2x96xf32> to vector<2x32xf32>
    %26 = arith.mulf %24, %10 : vector<2x32xf32>
    %27 = arith.mulf %23, %22 : vector<2x32xf32>
    %28 = arith.addf %26, %27 : vector<2x32xf32>
    %29 = math.tanh %28 : vector<2x32xf32>
    %30 = arith.mulf %25, %29 : vector<2x32xf32>
    %31 = vector.extract_strided_slice %7 {offsets = [0, 1, 0], sizes = [2, 1, 128], strides = [1, 1, 1]} : vector<2x8x128xf32> to vector<2x1x128xf32>
    %32 = vector.shape_cast %31 : vector<2x1x128xf32> to vector<2x128xf32>
    %cst_12 = arith.constant dense<0.000000e+00> : vector<2x128xf32>
    %33 = tpu.matmul %30, %8, %cst_12 {dimension_numbers = #tpu.dot_dimension_numbers<[1], [0], [0], [1], [0, 0, 1, 1], [], []>} : vector<2x32xf32>, vector<32x128xf32>, vector<2x128xf32> -> vector<2x128xf32>
    %34 = arith.addf %32, %33 : vector<2x128xf32>
    %35 = vector.extract_strided_slice %34 {offsets = [0, 0], sizes = [2, 96], strides = [1, 1]} : vector<2x128xf32> to vector<2x96xf32>
    %36 = arith.negf %35 : vector<2x96xf32>
    %37 = math.exp %36 : vector<2x96xf32>
    %cst_13 = arith.constant 1.000000e+00 : f32
    %38 = vector.broadcast %cst_13 : f32 to vector<2x96xf32>
    %39 = arith.addf %38, %37 : vector<2x96xf32>
    %40 = arith.divf %38, %39 : vector<2x96xf32>
    %41 = vector.extract_strided_slice %34 {offsets = [0, 96], sizes = [2, 32], strides = [1, 1]} : vector<2x128xf32> to vector<2x32xf32>
    %42 = math.tanh %41 : vector<2x32xf32>
    %43 = vector.extract_strided_slice %40 {offsets = [0, 0], sizes = [2, 32], strides = [1, 1]} : vector<2x96xf32> to vector<2x32xf32>
    %44 = vector.extract_strided_slice %40 {offsets = [0, 32], sizes = [2, 32], strides = [1, 1]} : vector<2x96xf32> to vector<2x32xf32>
    %45 = vector.extract_strided_slice %40 {offsets = [0, 64], sizes = [2, 32], strides = [1, 1]} : vector<2x96xf32> to vector<2x32xf32>
    %46 = arith.mulf %44, %28 : vector<2x32xf32>
    %47 = arith.mulf %43, %42 : vector<2x32xf32>
    %48 = arith.addf %46, %47 : vector<2x32xf32>
    %49 = math.tanh %48 : vector<2x32xf32>
    %50 = arith.mulf %45, %49 : vector<2x32xf32>
    %51 = vector.extract_strided_slice %7 {offsets = [0, 2, 0], sizes = [2, 1, 128], strides = [1, 1, 1]} : vector<2x8x128xf32> to vector<2x1x128xf32>
    %52 = vector.shape_cast %51 : vector<2x1x128xf32> to vector<2x128xf32>
    %cst_14 = arith.constant dense<0.000000e+00> : vector<2x128xf32>
    %53 = tpu.matmul %50, %8, %cst_14 {dimension_numbers = #tpu.dot_dimension_numbers<[1], [0], [0], [1], [0, 0, 1, 1], [], []>} : vector<2x32xf32>, vector<32x128xf32>, vector<2x128xf32> -> vector<2x128xf32>
    %54 = arith.addf %52, %53 : vector<2x128xf32>
    %55 = vector.extract_strided_slice %54 {offsets = [0, 0], sizes = [2, 96], strides = [1, 1]} : vector<2x128xf32> to vector<2x96xf32>
    %56 = arith.negf %55 : vector<2x96xf32>
    %57 = math.exp %56 : vector<2x96xf32>
    %cst_15 = arith.constant 1.000000e+00 : f32
    %58 = vector.broadcast %cst_15 : f32 to vector<2x96xf32>
    %59 = arith.addf %58, %57 : vector<2x96xf32>
    %60 = arith.divf %58, %59 : vector<2x96xf32>
    %61 = vector.extract_strided_slice %54 {offsets = [0, 96], sizes = [2, 32], strides = [1, 1]} : vector<2x128xf32> to vector<2x32xf32>
    %62 = math.tanh %61 : vector<2x32xf32>
    %63 = vector.extract_strided_slice %60 {offsets = [0, 0], sizes = [2, 32], strides = [1, 1]} : vector<2x96xf32> to vector<2x32xf32>
    %64 = vector.extract_strided_slice %60 {offsets = [0, 32], sizes = [2, 32], strides = [1, 1]} : vector<2x96xf32> to vector<2x32xf32>
    %65 = vector.extract_strided_slice %60 {offsets = [0, 64], sizes = [2, 32], strides = [1, 1]} : vector<2x96xf32> to vector<2x32xf32>
    %66 = arith.mulf %64, %48 : vector<2x32xf32>
    %67 = arith.mulf %63, %62 : vector<2x32xf32>
    %68 = arith.addf %66, %67 : vector<2x32xf32>
    %69 = math.tanh %68 : vector<2x32xf32>
    %70 = arith.mulf %65, %69 : vector<2x32xf32>
    %71 = vector.extract_strided_slice %7 {offsets = [0, 3, 0], sizes = [2, 1, 128], strides = [1, 1, 1]} : vector<2x8x128xf32> to vector<2x1x128xf32>
    %72 = vector.shape_cast %71 : vector<2x1x128xf32> to vector<2x128xf32>
    %cst_16 = arith.constant dense<0.000000e+00> : vector<2x128xf32>
    %73 = tpu.matmul %70, %8, %cst_16 {dimension_numbers = #tpu.dot_dimension_numbers<[1], [0], [0], [1], [0, 0, 1, 1], [], []>} : vector<2x32xf32>, vector<32x128xf32>, vector<2x128xf32> -> vector<2x128xf32>
    %74 = arith.addf %72, %73 : vector<2x128xf32>
    %75 = vector.extract_strided_slice %74 {offsets = [0, 0], sizes = [2, 96], strides = [1, 1]} : vector<2x128xf32> to vector<2x96xf32>
    %76 = arith.negf %75 : vector<2x96xf32>
    %77 = math.exp %76 : vector<2x96xf32>
    %cst_17 = arith.constant 1.000000e+00 : f32
    %78 = vector.broadcast %cst_17 : f32 to vector<2x96xf32>
    %79 = arith.addf %78, %77 : vector<2x96xf32>
    %80 = arith.divf %78, %79 : vector<2x96xf32>
    %81 = vector.extract_strided_slice %74 {offsets = [0, 96], sizes = [2, 32], strides = [1, 1]} : vector<2x128xf32> to vector<2x32xf32>
    %82 = math.tanh %81 : vector<2x32xf32>
    %83 = vector.extract_strided_slice %80 {offsets = [0, 0], sizes = [2, 32], strides = [1, 1]} : vector<2x96xf32> to vector<2x32xf32>
    %84 = vector.extract_strided_slice %80 {offsets = [0, 32], sizes = [2, 32], strides = [1, 1]} : vector<2x96xf32> to vector<2x32xf32>
    %85 = vector.extract_strided_slice %80 {offsets = [0, 64], sizes = [2, 32], strides = [1, 1]} : vector<2x96xf32> to vector<2x32xf32>
    %86 = arith.mulf %84, %68 : vector<2x32xf32>
    %87 = arith.mulf %83, %82 : vector<2x32xf32>
    %88 = arith.addf %86, %87 : vector<2x32xf32>
    %89 = math.tanh %88 : vector<2x32xf32>
    %90 = arith.mulf %85, %89 : vector<2x32xf32>
    %91 = vector.extract_strided_slice %7 {offsets = [0, 4, 0], sizes = [2, 1, 128], strides = [1, 1, 1]} : vector<2x8x128xf32> to vector<2x1x128xf32>
    %92 = vector.shape_cast %91 : vector<2x1x128xf32> to vector<2x128xf32>
    %cst_18 = arith.constant dense<0.000000e+00> : vector<2x128xf32>
    %93 = tpu.matmul %90, %8, %cst_18 {dimension_numbers = #tpu.dot_dimension_numbers<[1], [0], [0], [1], [0, 0, 1, 1], [], []>} : vector<2x32xf32>, vector<32x128xf32>, vector<2x128xf32> -> vector<2x128xf32>
    %94 = arith.addf %92, %93 : vector<2x128xf32>
    %95 = vector.extract_strided_slice %94 {offsets = [0, 0], sizes = [2, 96], strides = [1, 1]} : vector<2x128xf32> to vector<2x96xf32>
    %96 = arith.negf %95 : vector<2x96xf32>
    %97 = math.exp %96 : vector<2x96xf32>
    %cst_19 = arith.constant 1.000000e+00 : f32
    %98 = vector.broadcast %cst_19 : f32 to vector<2x96xf32>
    %99 = arith.addf %98, %97 : vector<2x96xf32>
    %100 = arith.divf %98, %99 : vector<2x96xf32>
    %101 = vector.extract_strided_slice %94 {offsets = [0, 96], sizes = [2, 32], strides = [1, 1]} : vector<2x128xf32> to vector<2x32xf32>
    %102 = math.tanh %101 : vector<2x32xf32>
    %103 = vector.extract_strided_slice %100 {offsets = [0, 0], sizes = [2, 32], strides = [1, 1]} : vector<2x96xf32> to vector<2x32xf32>
    %104 = vector.extract_strided_slice %100 {offsets = [0, 32], sizes = [2, 32], strides = [1, 1]} : vector<2x96xf32> to vector<2x32xf32>
    %105 = vector.extract_strided_slice %100 {offsets = [0, 64], sizes = [2, 32], strides = [1, 1]} : vector<2x96xf32> to vector<2x32xf32>
    %106 = arith.mulf %104, %88 : vector<2x32xf32>
    %107 = arith.mulf %103, %102 : vector<2x32xf32>
    %108 = arith.addf %106, %107 : vector<2x32xf32>
    %109 = math.tanh %108 : vector<2x32xf32>
    %110 = arith.mulf %105, %109 : vector<2x32xf32>
    %111 = vector.extract_strided_slice %7 {offsets = [0, 5, 0], sizes = [2, 1, 128], strides = [1, 1, 1]} : vector<2x8x128xf32> to vector<2x1x128xf32>
    %112 = vector.shape_cast %111 : vector<2x1x128xf32> to vector<2x128xf32>
    %cst_20 = arith.constant dense<0.000000e+00> : vector<2x128xf32>
    %113 = tpu.matmul %110, %8, %cst_20 {dimension_numbers = #tpu.dot_dimension_numbers<[1], [0], [0], [1], [0, 0, 1, 1], [], []>} : vector<2x32xf32>, vector<32x128xf32>, vector<2x128xf32> -> vector<2x128xf32>
    %114 = arith.addf %112, %113 : vector<2x128xf32>
    %115 = vector.extract_strided_slice %114 {offsets = [0, 0], sizes = [2, 96], strides = [1, 1]} : vector<2x128xf32> to vector<2x96xf32>
    %116 = arith.negf %115 : vector<2x96xf32>
    %117 = math.exp %116 : vector<2x96xf32>
    %cst_21 = arith.constant 1.000000e+00 : f32
    %118 = vector.broadcast %cst_21 : f32 to vector<2x96xf32>
    %119 = arith.addf %118, %117 : vector<2x96xf32>
    %120 = arith.divf %118, %119 : vector<2x96xf32>
    %121 = vector.extract_strided_slice %114 {offsets = [0, 96], sizes = [2, 32], strides = [1, 1]} : vector<2x128xf32> to vector<2x32xf32>
    %122 = math.tanh %121 : vector<2x32xf32>
    %123 = vector.extract_strided_slice %120 {offsets = [0, 0], sizes = [2, 32], strides = [1, 1]} : vector<2x96xf32> to vector<2x32xf32>
    %124 = vector.extract_strided_slice %120 {offsets = [0, 32], sizes = [2, 32], strides = [1, 1]} : vector<2x96xf32> to vector<2x32xf32>
    %125 = vector.extract_strided_slice %120 {offsets = [0, 64], sizes = [2, 32], strides = [1, 1]} : vector<2x96xf32> to vector<2x32xf32>
    %126 = arith.mulf %124, %108 : vector<2x32xf32>
    %127 = arith.mulf %123, %122 : vector<2x32xf32>
    %128 = arith.addf %126, %127 : vector<2x32xf32>
    %129 = math.tanh %128 : vector<2x32xf32>
    %130 = arith.mulf %125, %129 : vector<2x32xf32>
    %131 = vector.extract_strided_slice %7 {offsets = [0, 6, 0], sizes = [2, 1, 128], strides = [1, 1, 1]} : vector<2x8x128xf32> to vector<2x1x128xf32>
    %132 = vector.shape_cast %131 : vector<2x1x128xf32> to vector<2x128xf32>
    %cst_22 = arith.constant dense<0.000000e+00> : vector<2x128xf32>
    %133 = tpu.matmul %130, %8, %cst_22 {dimension_numbers = #tpu.dot_dimension_numbers<[1], [0], [0], [1], [0, 0, 1, 1], [], []>} : vector<2x32xf32>, vector<32x128xf32>, vector<2x128xf32> -> vector<2x128xf32>
    %134 = arith.addf %132, %133 : vector<2x128xf32>
    %135 = vector.extract_strided_slice %134 {offsets = [0, 0], sizes = [2, 96], strides = [1, 1]} : vector<2x128xf32> to vector<2x96xf32>
    %136 = arith.negf %135 : vector<2x96xf32>
    %137 = math.exp %136 : vector<2x96xf32>
    %cst_23 = arith.constant 1.000000e+00 : f32
    %138 = vector.broadcast %cst_23 : f32 to vector<2x96xf32>
    %139 = arith.addf %138, %137 : vector<2x96xf32>
    %140 = arith.divf %138, %139 : vector<2x96xf32>
    %141 = vector.extract_strided_slice %134 {offsets = [0, 96], sizes = [2, 32], strides = [1, 1]} : vector<2x128xf32> to vector<2x32xf32>
    %142 = math.tanh %141 : vector<2x32xf32>
    %143 = vector.extract_strided_slice %140 {offsets = [0, 0], sizes = [2, 32], strides = [1, 1]} : vector<2x96xf32> to vector<2x32xf32>
    %144 = vector.extract_strided_slice %140 {offsets = [0, 32], sizes = [2, 32], strides = [1, 1]} : vector<2x96xf32> to vector<2x32xf32>
    %145 = vector.extract_strided_slice %140 {offsets = [0, 64], sizes = [2, 32], strides = [1, 1]} : vector<2x96xf32> to vector<2x32xf32>
    %146 = arith.mulf %144, %128 : vector<2x32xf32>
    %147 = arith.mulf %143, %142 : vector<2x32xf32>
    %148 = arith.addf %146, %147 : vector<2x32xf32>
    %149 = math.tanh %148 : vector<2x32xf32>
    %150 = arith.mulf %145, %149 : vector<2x32xf32>
    %151 = vector.extract_strided_slice %7 {offsets = [0, 7, 0], sizes = [2, 1, 128], strides = [1, 1, 1]} : vector<2x8x128xf32> to vector<2x1x128xf32>
    %152 = vector.shape_cast %151 : vector<2x1x128xf32> to vector<2x128xf32>
    %cst_24 = arith.constant dense<0.000000e+00> : vector<2x128xf32>
    %153 = tpu.matmul %150, %8, %cst_24 {dimension_numbers = #tpu.dot_dimension_numbers<[1], [0], [0], [1], [0, 0, 1, 1], [], []>} : vector<2x32xf32>, vector<32x128xf32>, vector<2x128xf32> -> vector<2x128xf32>
    %154 = arith.addf %152, %153 : vector<2x128xf32>
    %155 = vector.extract_strided_slice %154 {offsets = [0, 0], sizes = [2, 96], strides = [1, 1]} : vector<2x128xf32> to vector<2x96xf32>
    %156 = arith.negf %155 : vector<2x96xf32>
    %157 = math.exp %156 : vector<2x96xf32>
    %cst_25 = arith.constant 1.000000e+00 : f32
    %158 = vector.broadcast %cst_25 : f32 to vector<2x96xf32>
    %159 = arith.addf %158, %157 : vector<2x96xf32>
    %160 = arith.divf %158, %159 : vector<2x96xf32>
    %161 = vector.extract_strided_slice %154 {offsets = [0, 96], sizes = [2, 32], strides = [1, 1]} : vector<2x128xf32> to vector<2x32xf32>
    %162 = math.tanh %161 : vector<2x32xf32>
    %163 = vector.extract_strided_slice %160 {offsets = [0, 0], sizes = [2, 32], strides = [1, 1]} : vector<2x96xf32> to vector<2x32xf32>
    %164 = vector.extract_strided_slice %160 {offsets = [0, 32], sizes = [2, 32], strides = [1, 1]} : vector<2x96xf32> to vector<2x32xf32>
    %165 = vector.extract_strided_slice %160 {offsets = [0, 64], sizes = [2, 32], strides = [1, 1]} : vector<2x96xf32> to vector<2x32xf32>
    %166 = arith.mulf %164, %148 : vector<2x32xf32>
    %167 = arith.mulf %163, %162 : vector<2x32xf32>
    %168 = arith.addf %166, %167 : vector<2x32xf32>
    %169 = math.tanh %168 : vector<2x32xf32>
    %170 = arith.mulf %165, %169 : vector<2x32xf32>
    %c0_26 = arith.constant 0 : index
    %c0_27 = arith.constant 0 : index
    %171 = vector.load %arg5[%c0_26, %c0_27] : memref<32x64xf32, #tpu.memory_space<vmem>>, vector<32x64xf32>
    %cst_28 = arith.constant dense<0.000000e+00> : vector<2x64xf32>
    %172 = tpu.matmul %170, %171, %cst_28 {dimension_numbers = #tpu.dot_dimension_numbers<[1], [0], [0], [1], [0, 0, 1, 1], [], []>} : vector<2x32xf32>, vector<32x64xf32>, vector<2x64xf32> -> vector<2x64xf32>
    %c0_29 = arith.constant 0 : index
    %c0_30 = arith.constant 0 : index
    %173 = vector.load %arg6[%c0_29, %c0_30] : memref<1x64xf32, #tpu.memory_space<vmem>>, vector<1x64xf32>
    %174 = vector.broadcast %173 : vector<1x64xf32> to vector<2x64xf32>
    %175 = arith.addf %172, %174 : vector<2x64xf32>
    %176 = vector.extract_strided_slice %175 {offsets = [0, 0], sizes = [2, 32], strides = [1, 1]} : vector<2x64xf32> to vector<2x32xf32>
    %177 = vector.extract_strided_slice %175 {offsets = [0, 32], sizes = [2, 32], strides = [1, 1]} : vector<2x64xf32> to vector<2x32xf32>
    %cst_31 = arith.constant 5.000000e-01 : f32
    %178 = vector.broadcast %cst_31 : f32 to vector<2x32xf32>
    %179 = arith.mulf %178, %177 : vector<2x32xf32>
    %180 = math.exp %179 : vector<2x32xf32>
    %c0_32 = arith.constant 0 : index
    %c0_33 = arith.constant 0 : index
    %181 = vector.load %arg1[%c0_32, %c0_33] : memref<2x32xf32, #tpu.memory_space<vmem>>, vector<2x32xf32>
    %182 = arith.mulf %180, %181 : vector<2x32xf32>
    %183 = arith.addf %176, %182 : vector<2x32xf32>
    %c0_34 = arith.constant 0 : index
    %c0_35 = arith.constant 0 : index
    %184 = vector.load %arg7[%c0_34, %c0_35] : memref<32x4xf32, #tpu.memory_space<vmem>>, vector<32x4xf32>
    %cst_36 = arith.constant dense<0.000000e+00> : vector<2x4xf32>
    %185 = tpu.matmul %183, %184, %cst_36 {dimension_numbers = #tpu.dot_dimension_numbers<[1], [0], [0], [1], [0, 0, 1, 1], [], []>} : vector<2x32xf32>, vector<32x4xf32>, vector<2x4xf32> -> vector<2x4xf32>
    %c0_37 = arith.constant 0 : index
    %c0_38 = arith.constant 0 : index
    %186 = vector.load %arg8[%c0_37, %c0_38] : memref<1x4xf32, #tpu.memory_space<vmem>>, vector<1x4xf32>
    %187 = vector.broadcast %186 : vector<1x4xf32> to vector<2x4xf32>
    %188 = arith.addf %185, %187 : vector<2x4xf32>
    %c0_39 = arith.constant 0 : index
    %c0_40 = arith.constant 0 : index
    %189 = vector.load %arg11[%c0_39, %c0_40] : memref<4x16xf32, #tpu.memory_space<vmem>>, vector<4x16xf32>
    %c0_41 = arith.constant 0 : index
    %c0_42 = arith.constant 0 : index
    %190 = vector.load %arg12[%c0_41, %c0_42] : memref<1x16xf32, #tpu.memory_space<vmem>>, vector<1x16xf32>
    %c0_43 = arith.constant 0 : index
    %c0_44 = arith.constant 0 : index
    %191 = vector.load %arg9[%c0_43, %c0_44] : memref<4x16xf32, #tpu.memory_space<vmem>>, vector<4x16xf32>
    %cst_45 = arith.constant dense<0.000000e+00> : vector<2x16xf32>
    %192 = tpu.matmul %188, %191, %cst_45 {dimension_numbers = #tpu.dot_dimension_numbers<[1], [0], [0], [1], [0, 0, 1, 1], [], []>} : vector<2x4xf32>, vector<4x16xf32>, vector<2x16xf32> -> vector<2x16xf32>
    %c0_46 = arith.constant 0 : index
    %c0_47 = arith.constant 0 : index
    %193 = vector.load %arg10[%c0_46, %c0_47] : memref<1x16xf32, #tpu.memory_space<vmem>>, vector<1x16xf32>
    %194 = vector.broadcast %193 : vector<1x16xf32> to vector<2x16xf32>
    %195 = arith.addf %192, %194 : vector<2x16xf32>
    %cst_48 = arith.constant 0.000000e+00 : f32
    %196 = vector.broadcast %cst_48 : f32 to vector<2x4xf32>
    %197 = vector.extract_strided_slice %195 {offsets = [0, 0], sizes = [2, 12], strides = [1, 1]} : vector<2x16xf32> to vector<2x12xf32>
    %198 = arith.negf %197 : vector<2x12xf32>
    %199 = math.exp %198 : vector<2x12xf32>
    %cst_49 = arith.constant 1.000000e+00 : f32
    %200 = vector.broadcast %cst_49 : f32 to vector<2x12xf32>
    %201 = arith.addf %200, %199 : vector<2x12xf32>
    %202 = arith.divf %200, %201 : vector<2x12xf32>
    %203 = vector.extract_strided_slice %195 {offsets = [0, 12], sizes = [2, 4], strides = [1, 1]} : vector<2x16xf32> to vector<2x4xf32>
    %204 = math.tanh %203 : vector<2x4xf32>
    %205 = vector.extract_strided_slice %202 {offsets = [0, 0], sizes = [2, 4], strides = [1, 1]} : vector<2x12xf32> to vector<2x4xf32>
    %206 = vector.extract_strided_slice %202 {offsets = [0, 4], sizes = [2, 4], strides = [1, 1]} : vector<2x12xf32> to vector<2x4xf32>
    %207 = vector.extract_strided_slice %202 {offsets = [0, 8], sizes = [2, 4], strides = [1, 1]} : vector<2x12xf32> to vector<2x4xf32>
    %208 = arith.mulf %206, %196 : vector<2x4xf32>
    %209 = arith.mulf %205, %204 : vector<2x4xf32>
    %210 = arith.addf %208, %209 : vector<2x4xf32>
    %211 = math.tanh %210 : vector<2x4xf32>
    %212 = arith.mulf %207, %211 : vector<2x4xf32>
    %cst_50 = arith.constant dense<0.000000e+00> : vector<2x16xf32>
    %213 = tpu.matmul %212, %189, %cst_50 {dimension_numbers = #tpu.dot_dimension_numbers<[1], [0], [0], [1], [0, 0, 1, 1], [], []>} : vector<2x4xf32>, vector<4x16xf32>, vector<2x16xf32> -> vector<2x16xf32>
    %214 = vector.broadcast %190 : vector<1x16xf32> to vector<2x16xf32>
    %215 = arith.addf %213, %214 : vector<2x16xf32>
    %216 = vector.extract_strided_slice %215 {offsets = [0, 0], sizes = [2, 12], strides = [1, 1]} : vector<2x16xf32> to vector<2x12xf32>
    %217 = arith.negf %216 : vector<2x12xf32>
    %218 = math.exp %217 : vector<2x12xf32>
    %cst_51 = arith.constant 1.000000e+00 : f32
    %219 = vector.broadcast %cst_51 : f32 to vector<2x12xf32>
    %220 = arith.addf %219, %218 : vector<2x12xf32>
    %221 = arith.divf %219, %220 : vector<2x12xf32>
    %222 = vector.extract_strided_slice %215 {offsets = [0, 12], sizes = [2, 4], strides = [1, 1]} : vector<2x16xf32> to vector<2x4xf32>
    %223 = math.tanh %222 : vector<2x4xf32>
    %224 = vector.extract_strided_slice %221 {offsets = [0, 0], sizes = [2, 4], strides = [1, 1]} : vector<2x12xf32> to vector<2x4xf32>
    %225 = vector.extract_strided_slice %221 {offsets = [0, 4], sizes = [2, 4], strides = [1, 1]} : vector<2x12xf32> to vector<2x4xf32>
    %226 = vector.extract_strided_slice %221 {offsets = [0, 8], sizes = [2, 4], strides = [1, 1]} : vector<2x12xf32> to vector<2x4xf32>
    %227 = arith.mulf %225, %210 : vector<2x4xf32>
    %228 = arith.mulf %224, %223 : vector<2x4xf32>
    %229 = arith.addf %227, %228 : vector<2x4xf32>
    %230 = math.tanh %229 : vector<2x4xf32>
    %231 = arith.mulf %226, %230 : vector<2x4xf32>
    %cst_52 = arith.constant dense<0.000000e+00> : vector<2x16xf32>
    %232 = tpu.matmul %231, %189, %cst_52 {dimension_numbers = #tpu.dot_dimension_numbers<[1], [0], [0], [1], [0, 0, 1, 1], [], []>} : vector<2x4xf32>, vector<4x16xf32>, vector<2x16xf32> -> vector<2x16xf32>
    %233 = vector.broadcast %190 : vector<1x16xf32> to vector<2x16xf32>
    %234 = arith.addf %232, %233 : vector<2x16xf32>
    %235 = vector.extract_strided_slice %234 {offsets = [0, 0], sizes = [2, 12], strides = [1, 1]} : vector<2x16xf32> to vector<2x12xf32>
    %236 = arith.negf %235 : vector<2x12xf32>
    %237 = math.exp %236 : vector<2x12xf32>
    %cst_53 = arith.constant 1.000000e+00 : f32
    %238 = vector.broadcast %cst_53 : f32 to vector<2x12xf32>
    %239 = arith.addf %238, %237 : vector<2x12xf32>
    %240 = arith.divf %238, %239 : vector<2x12xf32>
    %241 = vector.extract_strided_slice %234 {offsets = [0, 12], sizes = [2, 4], strides = [1, 1]} : vector<2x16xf32> to vector<2x4xf32>
    %242 = math.tanh %241 : vector<2x4xf32>
    %243 = vector.extract_strided_slice %240 {offsets = [0, 0], sizes = [2, 4], strides = [1, 1]} : vector<2x12xf32> to vector<2x4xf32>
    %244 = vector.extract_strided_slice %240 {offsets = [0, 4], sizes = [2, 4], strides = [1, 1]} : vector<2x12xf32> to vector<2x4xf32>
    %245 = vector.extract_strided_slice %240 {offsets = [0, 8], sizes = [2, 4], strides = [1, 1]} : vector<2x12xf32> to vector<2x4xf32>
    %246 = arith.mulf %244, %229 : vector<2x4xf32>
    %247 = arith.mulf %243, %242 : vector<2x4xf32>
    %248 = arith.addf %246, %247 : vector<2x4xf32>
    %249 = math.tanh %248 : vector<2x4xf32>
    %250 = arith.mulf %245, %249 : vector<2x4xf32>
    %cst_54 = arith.constant dense<0.000000e+00> : vector<2x16xf32>
    %251 = tpu.matmul %250, %189, %cst_54 {dimension_numbers = #tpu.dot_dimension_numbers<[1], [0], [0], [1], [0, 0, 1, 1], [], []>} : vector<2x4xf32>, vector<4x16xf32>, vector<2x16xf32> -> vector<2x16xf32>
    %252 = vector.broadcast %190 : vector<1x16xf32> to vector<2x16xf32>
    %253 = arith.addf %251, %252 : vector<2x16xf32>
    %254 = vector.extract_strided_slice %253 {offsets = [0, 0], sizes = [2, 12], strides = [1, 1]} : vector<2x16xf32> to vector<2x12xf32>
    %255 = arith.negf %254 : vector<2x12xf32>
    %256 = math.exp %255 : vector<2x12xf32>
    %cst_55 = arith.constant 1.000000e+00 : f32
    %257 = vector.broadcast %cst_55 : f32 to vector<2x12xf32>
    %258 = arith.addf %257, %256 : vector<2x12xf32>
    %259 = arith.divf %257, %258 : vector<2x12xf32>
    %260 = vector.extract_strided_slice %253 {offsets = [0, 12], sizes = [2, 4], strides = [1, 1]} : vector<2x16xf32> to vector<2x4xf32>
    %261 = math.tanh %260 : vector<2x4xf32>
    %262 = vector.extract_strided_slice %259 {offsets = [0, 0], sizes = [2, 4], strides = [1, 1]} : vector<2x12xf32> to vector<2x4xf32>
    %263 = vector.extract_strided_slice %259 {offsets = [0, 4], sizes = [2, 4], strides = [1, 1]} : vector<2x12xf32> to vector<2x4xf32>
    %264 = vector.extract_strided_slice %259 {offsets = [0, 8], sizes = [2, 4], strides = [1, 1]} : vector<2x12xf32> to vector<2x4xf32>
    %265 = arith.mulf %263, %248 : vector<2x4xf32>
    %266 = arith.mulf %262, %261 : vector<2x4xf32>
    %267 = arith.addf %265, %266 : vector<2x4xf32>
    %268 = math.tanh %267 : vector<2x4xf32>
    %269 = arith.mulf %264, %268 : vector<2x4xf32>
    %cst_56 = arith.constant dense<0.000000e+00> : vector<2x16xf32>
    %270 = tpu.matmul %269, %189, %cst_56 {dimension_numbers = #tpu.dot_dimension_numbers<[1], [0], [0], [1], [0, 0, 1, 1], [], []>} : vector<2x4xf32>, vector<4x16xf32>, vector<2x16xf32> -> vector<2x16xf32>
    %271 = vector.broadcast %190 : vector<1x16xf32> to vector<2x16xf32>
    %272 = arith.addf %270, %271 : vector<2x16xf32>
    %273 = vector.extract_strided_slice %272 {offsets = [0, 0], sizes = [2, 12], strides = [1, 1]} : vector<2x16xf32> to vector<2x12xf32>
    %274 = arith.negf %273 : vector<2x12xf32>
    %275 = math.exp %274 : vector<2x12xf32>
    %cst_57 = arith.constant 1.000000e+00 : f32
    %276 = vector.broadcast %cst_57 : f32 to vector<2x12xf32>
    %277 = arith.addf %276, %275 : vector<2x12xf32>
    %278 = arith.divf %276, %277 : vector<2x12xf32>
    %279 = vector.extract_strided_slice %272 {offsets = [0, 12], sizes = [2, 4], strides = [1, 1]} : vector<2x16xf32> to vector<2x4xf32>
    %280 = math.tanh %279 : vector<2x4xf32>
    %281 = vector.extract_strided_slice %278 {offsets = [0, 0], sizes = [2, 4], strides = [1, 1]} : vector<2x12xf32> to vector<2x4xf32>
    %282 = vector.extract_strided_slice %278 {offsets = [0, 4], sizes = [2, 4], strides = [1, 1]} : vector<2x12xf32> to vector<2x4xf32>
    %283 = vector.extract_strided_slice %278 {offsets = [0, 8], sizes = [2, 4], strides = [1, 1]} : vector<2x12xf32> to vector<2x4xf32>
    %284 = arith.mulf %282, %267 : vector<2x4xf32>
    %285 = arith.mulf %281, %280 : vector<2x4xf32>
    %286 = arith.addf %284, %285 : vector<2x4xf32>
    %287 = math.tanh %286 : vector<2x4xf32>
    %288 = arith.mulf %283, %287 : vector<2x4xf32>
    %cst_58 = arith.constant dense<0.000000e+00> : vector<2x16xf32>
    %289 = tpu.matmul %288, %189, %cst_58 {dimension_numbers = #tpu.dot_dimension_numbers<[1], [0], [0], [1], [0, 0, 1, 1], [], []>} : vector<2x4xf32>, vector<4x16xf32>, vector<2x16xf32> -> vector<2x16xf32>
    %290 = vector.broadcast %190 : vector<1x16xf32> to vector<2x16xf32>
    %291 = arith.addf %289, %290 : vector<2x16xf32>
    %292 = vector.extract_strided_slice %291 {offsets = [0, 0], sizes = [2, 12], strides = [1, 1]} : vector<2x16xf32> to vector<2x12xf32>
    %293 = arith.negf %292 : vector<2x12xf32>
    %294 = math.exp %293 : vector<2x12xf32>
    %cst_59 = arith.constant 1.000000e+00 : f32
    %295 = vector.broadcast %cst_59 : f32 to vector<2x12xf32>
    %296 = arith.addf %295, %294 : vector<2x12xf32>
    %297 = arith.divf %295, %296 : vector<2x12xf32>
    %298 = vector.extract_strided_slice %291 {offsets = [0, 12], sizes = [2, 4], strides = [1, 1]} : vector<2x16xf32> to vector<2x4xf32>
    %299 = math.tanh %298 : vector<2x4xf32>
    %300 = vector.extract_strided_slice %297 {offsets = [0, 0], sizes = [2, 4], strides = [1, 1]} : vector<2x12xf32> to vector<2x4xf32>
    %301 = vector.extract_strided_slice %297 {offsets = [0, 4], sizes = [2, 4], strides = [1, 1]} : vector<2x12xf32> to vector<2x4xf32>
    %302 = vector.extract_strided_slice %297 {offsets = [0, 8], sizes = [2, 4], strides = [1, 1]} : vector<2x12xf32> to vector<2x4xf32>
    %303 = arith.mulf %301, %286 : vector<2x4xf32>
    %304 = arith.mulf %300, %299 : vector<2x4xf32>
    %305 = arith.addf %303, %304 : vector<2x4xf32>
    %306 = math.tanh %305 : vector<2x4xf32>
    %307 = arith.mulf %302, %306 : vector<2x4xf32>
    %cst_60 = arith.constant dense<0.000000e+00> : vector<2x16xf32>
    %308 = tpu.matmul %307, %189, %cst_60 {dimension_numbers = #tpu.dot_dimension_numbers<[1], [0], [0], [1], [0, 0, 1, 1], [], []>} : vector<2x4xf32>, vector<4x16xf32>, vector<2x16xf32> -> vector<2x16xf32>
    %309 = vector.broadcast %190 : vector<1x16xf32> to vector<2x16xf32>
    %310 = arith.addf %308, %309 : vector<2x16xf32>
    %311 = vector.extract_strided_slice %310 {offsets = [0, 0], sizes = [2, 12], strides = [1, 1]} : vector<2x16xf32> to vector<2x12xf32>
    %312 = arith.negf %311 : vector<2x12xf32>
    %313 = math.exp %312 : vector<2x12xf32>
    %cst_61 = arith.constant 1.000000e+00 : f32
    %314 = vector.broadcast %cst_61 : f32 to vector<2x12xf32>
    %315 = arith.addf %314, %313 : vector<2x12xf32>
    %316 = arith.divf %314, %315 : vector<2x12xf32>
    %317 = vector.extract_strided_slice %310 {offsets = [0, 12], sizes = [2, 4], strides = [1, 1]} : vector<2x16xf32> to vector<2x4xf32>
    %318 = math.tanh %317 : vector<2x4xf32>
    %319 = vector.extract_strided_slice %316 {offsets = [0, 0], sizes = [2, 4], strides = [1, 1]} : vector<2x12xf32> to vector<2x4xf32>
    %320 = vector.extract_strided_slice %316 {offsets = [0, 4], sizes = [2, 4], strides = [1, 1]} : vector<2x12xf32> to vector<2x4xf32>
    %321 = vector.extract_strided_slice %316 {offsets = [0, 8], sizes = [2, 4], strides = [1, 1]} : vector<2x12xf32> to vector<2x4xf32>
    %322 = arith.mulf %320, %305 : vector<2x4xf32>
    %323 = arith.mulf %319, %318 : vector<2x4xf32>
    %324 = arith.addf %322, %323 : vector<2x4xf32>
    %325 = math.tanh %324 : vector<2x4xf32>
    %326 = arith.mulf %321, %325 : vector<2x4xf32>
    %327 = vector.extract_strided_slice %326 {offsets = [0, 3], sizes = [2, 1], strides = [1, 1]} : vector<2x4xf32> to vector<2x1xf32>
    %328 = vector.extract_strided_slice %288 {offsets = [0, 3], sizes = [2, 1], strides = [1, 1]} : vector<2x4xf32> to vector<2x1xf32>
    %329 = vector.extract_strided_slice %250 {offsets = [0, 3], sizes = [2, 1], strides = [1, 1]} : vector<2x4xf32> to vector<2x1xf32>
    %330 = vector.extract_strided_slice %212 {offsets = [0, 3], sizes = [2, 1], strides = [1, 1]} : vector<2x4xf32> to vector<2x1xf32>
    %331 = tpu.concatenate %327, %328, %329, %330 in 1 : vector<2x1xf32>, vector<2x1xf32>, vector<2x1xf32>, vector<2x1xf32> -> vector<2x4xf32>
    %c0_62 = arith.constant 0 : index
    %c0_63 = arith.constant 0 : index
    %332 = vector.load %arg13[%c0_62, %c0_63] : memref<2x4xf32, #tpu.memory_space<vmem>>, vector<2x4xf32>
    tpu.vector_store %arg13[%c0_62, %c0_63], %331 {strides = array<i32>} : memref<2x4xf32, #tpu.memory_space<vmem>>, vector<2x4xf32>,
    return
  }
}

</mosaic_0001>

<llo_original>
// kernel: lstm_vae_forward.1
$region0: #{lstm_vae_forward.1}
  #allocation0 [shape = 'u32[]', space=smem, size = 0x4, offset = 0x4, fixed_abs, tag = 'smem constant byte address 0x4 - core index']
  #allocation1 [shape = 'u32[72,128]{1,0:T(1,128)}', space=vmem, size = 0x9000, scoped, tag = 'internal scratch']
  %s0 = inlined_call_operand.vmem [shape: f32[2,8,4], index: 0, kind: input, shape index: {}]
  %s1 = inlined_call_operand.vmem [shape: f32[2,32], index: 1, kind: input, shape index: {}]
  %s2 = inlined_call_operand.vmem [shape: f32[4,128], index: 2, kind: input, shape index: {}]
  %s3 = inlined_call_operand.vmem [shape: f32[32,128], index: 3, kind: input, shape index: {}]
  %s4 = inlined_call_operand.vmem [shape: f32[1,128], index: 4, kind: input, shape index: {}]
  %s5 = inlined_call_operand.hbm [shape: f32[32,64], index: 5, kind: input, shape index: {}]
  %s6 = inlined_call_operand.vmem [shape: f32[1,64], index: 6, kind: input, shape index: {}]
  %s7 = inlined_call_operand.vmem [shape: f32[32,4], index: 7, kind: input, shape index: {}]
  %s8 = inlined_call_operand.vmem [shape: f32[1,4], index: 8, kind: input, shape index: {}]
  %s9 = inlined_call_operand.vmem [shape: f32[4,16], index: 9, kind: input, shape index: {}]
  %s10 = inlined_call_operand.vmem [shape: f32[1,16], index: 10, kind: input, shape index: {}]
  %s11 = inlined_call_operand.vmem [shape: f32[4,16], index: 11, kind: input, shape index: {}]
  %s12 = inlined_call_operand.vmem [shape: f32[1,16], index: 12, kind: input, shape index: {}]
  %s13 = inlined_call_operand.hbm [shape: f32[2,4], index: 13, kind: output, shape index: {}]
  %s14 = sld [smem:[#allocation0]]
  $region66: #{lstm_vae_forward.1} parent=0
    _
  %s16 = ssub.s32 1, %s14
  %s17 = scalar_select 0, %s16, %s14
  $region1: #{lstm_vae_forward.1} parent=0
    #allocation2 [shape = 'u8[16384]{0}', space=vmem, size = 0x4000, scoped, tag = 'input window, operand 5, single buffered']
    #allocation3 [shape = 's32[1]{0}', space=sflag, size = 0x4, scoped, tag = 'scoped memory for lstm_vae_forward.1']
    #allocation4 [shape = 's32[1]{0}', space=sflag, size = 0x4, scoped, tag = 'scoped memory for lstm_vae_forward.1']
    #allocation5 [shape = 'u8[1024]{0}', space=vmem, size = 0x400, scoped, tag = 'output window, operand 0, single buffered']
    %18 = vsyncpa [#allocation3], 0
    %19 = vsyncpa [#allocation4], 0
    // Predicated region
    $region2: #{lstm_vae_forward.1} parent=1 // pred_check
      _
    $region3: #{lstm_vae_forward.1} parent=1 // pred_check_branch
      %21 = sbr.rel (0) target = $region5
    $region4: #{lstm_vae_forward.1} parent=1 // pred_region
      _
    $region5: #{lstm_vae_forward.1} parent=1 // pred_fallthru
      _
    // Predicated region
    $region6: #{lstm_vae_forward.1} parent=1 // pred_check
      _
    $region7: #{lstm_vae_forward.1} parent=1 // pred_check_branch
      %23 = sbr.rel (0) target = $region9
    $region8: #{lstm_vae_forward.1} parent=1 // pred_region
      _
    $region9: #{lstm_vae_forward.1} parent=1 // pred_fallthru
      _
    // Predicated region
    $region10: #{lstm_vae_forward.1} parent=1 // pred_check
      _
    $region11: #{lstm_vae_forward.1} parent=1 // pred_check_branch
      %25 = sbr.rel (0) target = $region13
    $region12: #{lstm_vae_forward.1} parent=1 // pred_region
      _
    $region13: #{lstm_vae_forward.1} parent=1 // pred_fallthru
      _
    // Predicated region
    $region14: #{lstm_vae_forward.1} parent=1 // pred_check
      _
    $region15: #{lstm_vae_forward.1} parent=1 // pred_check_branch
      %27 = sbr.rel (0) target = $region17
    $region16: #{lstm_vae_forward.1} parent=1 // pred_region
      _
    $region17: #{lstm_vae_forward.1} parent=1 // pred_fallthru
      _
    // Predicated region
    $region18: #{lstm_vae_forward.1} parent=1 // pred_check
      _
    $region19: #{lstm_vae_forward.1} parent=1 // pred_check_branch
      %29 = sbr.rel (0) target = $region21
    $region20: #{lstm_vae_forward.1} parent=1 // pred_region
      _
    $region21: #{lstm_vae_forward.1} parent=1 // pred_fallthru
      _
    // Predicated region
    $region22: #{lstm_vae_forward.1} parent=1 // pred_check
      _
    $region23: #{lstm_vae_forward.1} parent=1 // pred_check_branch
      %31 = sbr.rel (0) target = $region25
    $region24: #{lstm_vae_forward.1} parent=1 // pred_region
      %33 = vsyncadd [#allocation3], 0
      %s34 = sshll.u32 %s5, 4
      %s35 = int_to_ptr.hbm [resolvable:$true] %s34
      %s36 = sshll.u32 [#allocation2], 4
      %s37 = int_to_ptr.vmem [resolvable:$true] %s36
      %42 = dma.hbm_to_vmem [thread:$0]  %s35, 512, %s37, [#allocation3], 128, 128, 8
    $region25: #{lstm_vae_forward.1} parent=1 // pred_fallthru
      _
    // Predicated region
    $region26: #{lstm_vae_forward.1} parent=1 // pred_check
      _
    $region27: #{lstm_vae_forward.1} parent=1 // pred_check_branch
      %44 = sbr.rel (0) target = $region29
    $region28: #{lstm_vae_forward.1} parent=1 // pred_region
      _
    $region29: #{lstm_vae_forward.1} parent=1 // pred_fallthru
      _
    // Predicated region
    $region30: #{lstm_vae_forward.1} parent=1 // pred_check
      _
    $region31: #{lstm_vae_forward.1} parent=1 // pred_check_branch
      %46 = sbr.rel (0) target = $region33
    $region32: #{lstm_vae_forward.1} parent=1 // pred_region
      _
    $region33: #{lstm_vae_forward.1} parent=1 // pred_fallthru
      _
    // Predicated region
    $region34: #{lstm_vae_forward.1} parent=1 // pred_check
      _
    $region35: #{lstm_vae_forward.1} parent=1 // pred_check_branch
      %48 = sbr.rel (0) target = $region37
    $region36: #{lstm_vae_forward.1} parent=1 // pred_region
      _
    $region37: #{lstm_vae_forward.1} parent=1 // pred_fallthru
      _
    // Predicated region
    $region38: #{lstm_vae_forward.1} parent=1 // pred_check
      _
    $region39: #{lstm_vae_forward.1} parent=1 // pred_check_branch
      %50 = sbr.rel (0) target = $region41
    $region40: #{lstm_vae_forward.1} parent=1 // pred_region
      _
    $region41: #{lstm_vae_forward.1} parent=1 // pred_fallthru
      _
    // Predicated region
    $region42: #{lstm_vae_forward.1} parent=1 // pred_check
      _
    $region43: #{lstm_vae_forward.1} parent=1 // pred_check_branch
      %52 = sbr.rel (0) target = $region45
    $region44: #{lstm_vae_forward.1} parent=1 // pred_region
      _
    $region45: #{lstm_vae_forward.1} parent=1 // pred_fallthru
      _
    // Predicated region
    $region46: #{lstm_vae_forward.1} parent=1 // pred_check
      _
    $region47: #{lstm_vae_forward.1} parent=1 // pred_check_branch
      %54 = sbr.rel (0) target = $region49
    $region48: #{lstm_vae_forward.1} parent=1 // pred_region
      _
    $region49: #{lstm_vae_forward.1} parent=1 // pred_fallthru
      _
    // Predicated region
    $region50: #{lstm_vae_forward.1} parent=1 // pred_check
      _
    $region51: #{lstm_vae_forward.1} parent=1 // pred_check_branch
      %56 = sbr.rel (0) target = $region53
    $region52: #{lstm_vae_forward.1} parent=1 // pred_region
      _
    $region53: #{lstm_vae_forward.1} parent=1 // pred_fallthru
      _
    // Predicated region
    $region54: #{lstm_vae_forward.1} parent=1 // pred_check
      _
    $region55: #{lstm_vae_forward.1} parent=1 // pred_check_branch
      %58 = sbr.rel (0) target = $region57
    $region56: #{lstm_vae_forward.1} parent=1 // pred_region
      %60 = dma.done [#allocation3], 512
    $region57: #{lstm_vae_forward.1} parent=1 // pred_fallthru
      _
    %v61 = vld [vmem:[%s0] sm:$0xff]
    %v62 = vld [vmem:[%s0 + $0x8] sm:$0xff]
    %v63 = vld [vmem:[%s2] sm:$0xf]
    %v64 = vld [vmem:[%s4] sm:$0x1]
    %v66 = vperm.slane %v64, 0
    %vm68 = vcmask 31744
    %v70 = vsel %vm68, %v61, 0
    %v73 = vsel %vm68, %v62, 0
    %vm75 = vcmask 1043456
    %v77 = vsel %vm75, %v63, 0
    %79 = vmatpush.msra.mxu0 0.0
    %80 = vmatpush.msra.mxu0 0.0
    %81 = vmatpush.msra.mxu0 0.0
    %82 = vmatpush.msra.mxu0 0.0
    %83 = vmatpush.msra.mxu0 0.0
    %84 = vmatpush.msra.mxu0 0.0
    %85 = vmatpush.msra.mxu0 0.0
    %86 = vmatpush.msra.mxu0 0.0
    %87 = vmatpush.msra.mxu0 0.0
    %88 = vmatpush.msra.mxu0 0.0
    %89 = vmatpush.msra.mxu0 0.0
    %90 = vmatpush.msra.mxu0 0.0
    %91 = vmatpush.msra.mxu0 0.0
    %92 = vmatpush.msra.mxu0 0.0
    %93 = vmatpush.msra.mxu0 0.0
    %94 = vmatpush.msra.mxu0 %v77
    %95 = vmatmul.f32.gmra.mxu0 %v70
    %v96 = vpop.f32.mrf.mxu0
    %v97 = vadd.f32 %v66, %v96
    %98 = vmatmul.f32.gmra.mxu0 %v73
    %v99 = vpop.f32.mrf.mxu0
    %v100 = vadd.f32 %v66, %v99
    %101 = vdwg.mxu0
    %v102 = vld [vmem:[%s3] sm:$0xff]
    %v103 = vld [vmem:[%s3 + $0x8] sm:$0xff]
    %v104 = vld [vmem:[%s3 + $0x10] sm:$0xff]
    %v105 = vld [vmem:[%s3 + $0x18] sm:$0xff]
    %vm106 = vcmask 261120
    %v108 = vsel %vm106, 0.0, 0
    %110 = vmatpush.msra.mxu0 0.0
    %111 = vmatpush.msra.mxu0 0.0
    %112 = vmatpush.msra.mxu0 0.0
    %113 = vmatpush.msra.mxu0 0.0
    %114 = vmatpush.msra.mxu0 0.0
    %115 = vmatpush.msra.mxu0 0.0
    %116 = vmatpush.msra.mxu0 0.0
    %117 = vmatpush.msra.mxu0 0.0
    %118 = vmatpush.msra.mxu0 0.0
    %119 = vmatpush.msra.mxu0 0.0
    %120 = vmatpush.msra.mxu0 0.0
    %121 = vmatpush.msra.mxu0 0.0
    %122 = vmatpush.msra.mxu0 %v105
    %123 = vmatpush.msra.mxu0 %v104
    %124 = vmatpush.msra.mxu0 %v103
    %125 = vmatpush.msra.mxu0 %v102
    %126 = vmatmul.f32.gmra.mxu0 %v108
    %v127 = vpop.f32.mrf.mxu0
    %v128 = vadd.f32 0.0, %v127
    %129 = vdwg.mxu0
    %v131 = vrot.slane %v128, 1
    %v134 = vadd.f32 %v97, %v128
    %v135 = vadd.f32 %v100, %v131
    %v136 = vxor.u32 %v134, 2147483648
    %v137 = vxor.u32 %v135, 2147483648
    %v138 = vmul.f32 %v136, 1.442695
    %v139 = vpow.pop %v138
    %v140 = vmul.f32 %v137, 1.442695
    %v141 = vpow.pop %v140
    %v142 = vadd.f32 %v139, 1.0
    %v143 = vadd.f32 %v141, 1.0
    %v144 = vrcp.pop %v142
    %v145 = vmul.f32 %v142, %v144
    %v146 = vsub.f32 1.0, %v145
    %v147 = vmul.f32 %v144, %v146
    %v148 = vadd.f32 %v144, %v147
    %vm149 = vweird.f32 %v142
    %vm150 = vweird.f32 %v144
    %vm151 = vmor %vm149, %vm150
    %v152 = vsel %vm151, %v144, %v148
    %v153 = vand.u32 2147483647, %v142
    %vm154 = vcmp.eq.f32.partialorder %v153, 8.507059e+37
    %v155 = vand.u32 %v142, 2147483648
    %v156 = vor.u32 1.1754944e-38, %v155
    %v157 = vsel %vm154, %v156, %v152
    %v158 = vmul.f32 1.0, %v157
    %v159 = vrcp.pop %v143
    %v160 = vmul.f32 %v143, %v159
    %v161 = vsub.f32 1.0, %v160
    %v162 = vmul.f32 %v159, %v161
    %v163 = vadd.f32 %v159, %v162
    %vm164 = vweird.f32 %v143
    %vm165 = vweird.f32 %v159
    %vm166 = vmor %vm164, %vm165
    %v167 = vsel %vm166, %v159, %v163
    %v168 = vand.u32 2147483647, %v143
    %vm169 = vcmp.eq.f32.partialorder %v168, 8.507059e+37
    %v170 = vand.u32 %v143, 2147483648
    %v171 = vor.u32 1.1754944e-38, %v170
    %v172 = vsel %vm169, %v171, %v167
    %v173 = vmul.f32 1.0, %v172
    %v174 = vtanh.pop %v134
    %v175 = vtanh.pop %v135
    %v176 = vmul.f32 %v158, 0.0
    %v177 = vmul.f32 %v173, 0.0
    %180 = vrot.lane.b32.xlu0 %v174, 32
    %v181 = vpop.permute.xlu0 %180
    %182 = vrot.lane.b32.xlu0 %v175, 32
    %v183 = vpop.permute.xlu0 %182
    %v186 = vmul.f32 %v158, %v181
    %v187 = vmul.f32 %v173, %v183
    %190 = vrot.lane.b32.xlu0 %v186, 32
    %v191 = vpop.permute.xlu0 %190
    %192 = vrot.lane.b32.xlu0 %v187, 32
    %v193 = vpop.permute.xlu0 %192
    %v196 = vadd.f32 %v176, %v191
    %v197 = vadd.f32 %v177, %v193
    %v198 = vtanh.pop %v196
    %v199 = vtanh.pop %v197
    %202 = vrot.lane.b32.xlu0 %v198, 32
    %v203 = vpop.permute.xlu0 %202
    %204 = vrot.lane.b32.xlu0 %v199, 32
    %v205 = vpop.permute.xlu0 %204
    %v208 = vmul.f32 %v158, %v203
    %v209 = vmul.f32 %v173, %v205
    %v212 = vrot.slane %v209, 7
    %vm213 = vcmask 1041409
    %v214 = vsel %vm213, %v212, %v208
    %215 = vrot.lane.b32.xlu0 %v214, 64
    %v216 = vpop.permute.xlu0 %215
    %v217 = vsel %vm106, %v216, 0
    %219 = vmatpush.msra.mxu0 0.0
    %220 = vmatpush.msra.mxu0 0.0
    %221 = vmatpush.msra.mxu0 0.0
    %222 = vmatpush.msra.mxu0 0.0
    %223 = vmatpush.msra.mxu0 0.0
    %224 = vmatpush.msra.mxu0 0.0
    %225 = vmatpush.msra.mxu0 0.0
    %226 = vmatpush.msra.mxu0 0.0
    %227 = vmatpush.msra.mxu0 0.0
    %228 = vmatpush.msra.mxu0 0.0
    %229 = vmatpush.msra.mxu0 0.0
    %230 = vmatpush.msra.mxu0 0.0
    %231 = vmatpush.msra.mxu0 %v105
    %232 = vmatpush.msra.mxu0 %v104
    %233 = vmatpush.msra.mxu0 %v103
    %234 = vmatpush.msra.mxu0 %v102
    %235 = vmatmul.f32.gmra.mxu0 %v217
    %v236 = vpop.f32.mrf.mxu0
    %v237 = vadd.f32 0.0, %v236
    %238 = vdwg.mxu0
    %v240 = vrot.slane %v237, 7
    %v243 = vadd.f32 %v97, %v240
    %v244 = vadd.f32 %v100, %v237
    %v245 = vxor.u32 %v243, 2147483648
    %v246 = vxor.u32 %v244, 2147483648
    %v247 = vmul.f32 %v245, 1.442695
    %v248 = vpow.pop %v247
    %v249 = vmul.f32 %v246, 1.442695
    %v250 = vpow.pop %v249
    %v251 = vadd.f32 %v248, 1.0
    %v252 = vadd.f32 %v250, 1.0
    %v253 = vrcp.pop %v251
    %v254 = vmul.f32 %v251, %v253
    %v255 = vsub.f32 1.0, %v254
    %v256 = vmul.f32 %v253, %v255
    %v257 = vadd.f32 %v253, %v256
    %vm258 = vweird.f32 %v251
    %vm259 = vweird.f32 %v253
    %vm260 = vmor %vm258, %vm259
    %v261 = vsel %vm260, %v253, %v257
    %v262 = vand.u32 2147483647, %v251
    %vm263 = vcmp.eq.f32.partialorder %v262, 8.507059e+37
    %v264 = vand.u32 %v251, 2147483648
    %v265 = vor.u32 1.1754944e-38, %v264
    %v266 = vsel %vm263, %v265, %v261
    %v267 = vmul.f32 1.0, %v266
    %v268 = vrcp.pop %v252
    %v269 = vmul.f32 %v252, %v268
    %v270 = vsub.f32 1.0, %v269
    %v271 = vmul.f32 %v268, %v270
    %v272 = vadd.f32 %v268, %v271
    %vm273 = vweird.f32 %v252
    %vm274 = vweird.f32 %v268
    %vm275 = vmor %vm273, %vm274
    %v276 = vsel %vm275, %v268, %v272
    %v277 = vand.u32 2147483647, %v252
    %vm278 = vcmp.eq.f32.partialorder %v277, 8.507059e+37
    %v279 = vand.u32 %v252, 2147483648
    %v280 = vor.u32 1.1754944e-38, %v279
    %v281 = vsel %vm278, %v280, %v276
    %v282 = vmul.f32 1.0, %v281
    %v283 = vtanh.pop %v243
    %v284 = vtanh.pop %v244
    %v287 = vrot.slane %v196, 7
    %v288 = vrot.slane %v197, 7
    %v291 = vmul.f32 %v267, %v287
    %v292 = vmul.f32 %v282, %v288
    %295 = vrot.lane.b32.xlu0 %v283, 32
    %v296 = vpop.permute.xlu0 %295
    %297 = vrot.lane.b32.xlu0 %v284, 32
    %v298 = vpop.permute.xlu0 %297
    %v301 = vmul.f32 %v267, %v296
    %v302 = vmul.f32 %v282, %v298
    %305 = vrot.lane.b32.xlu0 %v301, 32
    %v306 = vpop.permute.xlu0 %305
    %307 = vrot.lane.b32.xlu0 %v302, 32
    %v308 = vpop.permute.xlu0 %307
    %v311 = vadd.f32 %v291, %v306
    %v312 = vadd.f32 %v292, %v308
    %v313 = vtanh.pop %v311
    %v314 = vtanh.pop %v312
    %317 = vrot.lane.b32.xlu0 %v313, 32
    %v318 = vpop.permute.xlu0 %317
    %319 = vrot.lane.b32.xlu0 %v314, 32
    %v320 = vpop.permute.xlu0 %319
    %v323 = vmul.f32 %v267, %v318
    %v324 = vmul.f32 %v282, %v320
    %v327 = vrot.slane %v323, 1
    %v328 = vsel %vm213, %v324, %v327
    %329 = vrot.lane.b32.xlu0 %v328, 64
    %v330 = vpop.permute.xlu0 %329
    %v331 = vsel %vm106, %v330, 0
    %333 = vmatpush.msra.mxu0 0.0
    %334 = vmatpush.msra.mxu0 0.0
    %335 = vmatpush.msra.mxu0 0.0
    %336 = vmatpush.msra.mxu0 0.0
    %337 = vmatpush.msra.mxu0 0.0
    %338 = vmatpush.msra.mxu0 0.0
    %339 = vmatpush.msra.mxu0 0.0
    %340 = vmatpush.msra.mxu0 0.0
    %341 = vmatpush.msra.mxu0 0.0
    %342 = vmatpush.msra.mxu0 0.0
    %343 = vmatpush.msra.mxu0 0.0
    %344 = vmatpush.msra.mxu0 0.0
    %345 = vmatpush.msra.mxu0 %v105
    %346 = vmatpush.msra.mxu0 %v104
    %347 = vmatpush.msra.mxu0 %v103
    %348 = vmatpush.msra.mxu0 %v102
    %349 = vmatmul.f32.gmra.mxu0 %v331
    %v350 = vpop.f32.mrf.mxu0
    %v351 = vadd.f32 0.0, %v350
    %352 = vdwg.mxu0
    %v354 = vrot.slane %v351, 6
    %v355 = vrot.slane %v351, 7
    %v358 = vadd.f32 %v97, %v354
    %v359 = vadd.f32 %v100, %v355
    %v360 = vxor.u32 %v358, 2147483648
    %v361 = vxor.u32 %v359, 2147483648
    %v362 = vmul.f32 %v360, 1.442695
    %v363 = vpow.pop %v362
    %v364 = vmul.f32 %v361, 1.442695
    %v365 = vpow.pop %v364
    %v366 = vadd.f32 %v363, 1.0
    %v367 = vadd.f32 %v365, 1.0
    %v368 = vrcp.pop %v366
    %v369 = vmul.f32 %v366, %v368
    %v370 = vsub.f32 1.0, %v369
    %v371 = vmul.f32 %v368, %v370
    %v372 = vadd.f32 %v368, %v371
    %vm373 = vweird.f32 %v366
    %vm374 = vweird.f32 %v368
    %vm375 = vmor %vm373, %vm374
    %v376 = vsel %vm375, %v368, %v372
    %v377 = vand.u32 2147483647, %v366
    %vm378 = vcmp.eq.f32.partialorder %v377, 8.507059e+37
    %v379 = vand.u32 %v366, 2147483648
    %v380 = vor.u32 1.1754944e-38, %v379
    %v381 = vsel %vm378, %v380, %v376
    %v382 = vmul.f32 1.0, %v381
    %v383 = vrcp.pop %v367
    %v384 = vmul.f32 %v367, %v383
    %v385 = vsub.f32 1.0, %v384
    %v386 = vmul.f32 %v383, %v385
    %v387 = vadd.f32 %v383, %v386
    %vm388 = vweird.f32 %v367
    %vm389 = vweird.f32 %v383
    %vm390 = vmor %vm388, %vm389
    %v391 = vsel %vm390, %v383, %v387
    %v392 = vand.u32 2147483647, %v367
    %vm393 = vcmp.eq.f32.partialorder %v392, 8.507059e+37
    %v394 = vand.u32 %v367, 2147483648
    %v395 = vor.u32 1.1754944e-38, %v394
    %v396 = vsel %vm393, %v395, %v391
    %v397 = vmul.f32 1.0, %v396
    %v398 = vtanh.pop %v358
    %v399 = vtanh.pop %v359
    %v402 = vrot.slane %v311, 7
    %v403 = vrot.slane %v312, 7
    %v406 = vmul.f32 %v382, %v402
    %v407 = vmul.f32 %v397, %v403
    %410 = vrot.lane.b32.xlu0 %v398, 32
    %v411 = vpop.permute.xlu0 %410
    %412 = vrot.lane.b32.xlu0 %v399, 32
    %v413 = vpop.permute.xlu0 %412
    %v416 = vmul.f32 %v382, %v411
    %v417 = vmul.f32 %v397, %v413
    %420 = vrot.lane.b32.xlu0 %v416, 32
    %v421 = vpop.permute.xlu0 %420
    %422 = vrot.lane.b32.xlu0 %v417, 32
    %v423 = vpop.permute.xlu0 %422
    %v426 = vadd.f32 %v406, %v421
    %v427 = vadd.f32 %v407, %v423
    %v428 = vtanh.pop %v426
    %v429 = vtanh.pop %v427
    %432 = vrot.lane.b32.xlu0 %v428, 32
    %v433 = vpop.permute.xlu0 %432
    %434 = vrot.lane.b32.xlu0 %v429, 32
    %v435 = vpop.permute.xlu0 %434
    %v438 = vmul.f32 %v382, %v433
    %v439 = vmul.f32 %v397, %v435
    %v442 = vrot.slane %v438, 2
    %v443 = vrot.slane %v439, 1
    %v444 = vsel %vm213, %v443, %v442
    %445 = vrot.lane.b32.xlu0 %v444, 64
    %v446 = vpop.permute.xlu0 %445
    %v447 = vsel %vm106, %v446, 0
    %449 = vmatpush.msra.mxu0 0.0
    %450 = vmatpush.msra.mxu0 0.0
    %451 = vmatpush.msra.mxu0 0.0
    %452 = vmatpush.msra.mxu0 0.0
    %453 = vmatpush.msra.mxu0 0.0
    %454 = vmatpush.msra.mxu0 0.0
    %455 = vmatpush.msra.mxu0 0.0
    %456 = vmatpush.msra.mxu0 0.0
    %457 = vmatpush.msra.mxu0 0.0
    %458 = vmatpush.msra.mxu0 0.0
    %459 = vmatpush.msra.mxu0 0.0
    %460 = vmatpush.msra.mxu0 0.0
    %461 = vmatpush.msra.mxu0 %v105
    %462 = vmatpush.msra.mxu0 %v104
    %463 = vmatpush.msra.mxu0 %v103
    %464 = vmatpush.msra.mxu0 %v102
    %465 = vmatmul.f32.gmra.mxu0 %v447
    %v466 = vpop.f32.mrf.mxu0
    %v467 = vadd.f32 0.0, %v466
    %468 = vdwg.mxu0
    %v470 = vrot.slane %v467, 5
    %v471 = vrot.slane %v467, 6
    %v474 = vadd.f32 %v97, %v470
    %v475 = vadd.f32 %v100, %v471
    %v476 = vxor.u32 %v474, 2147483648
    %v477 = vxor.u32 %v475, 2147483648
    %v478 = vmul.f32 %v476, 1.442695
    %v479 = vpow.pop %v478
    %v480 = vmul.f32 %v477, 1.442695
    %v481 = vpow.pop %v480
    %v482 = vadd.f32 %v479, 1.0
    %v483 = vadd.f32 %v481, 1.0
    %v484 = vrcp.pop %v482
    %v485 = vmul.f32 %v482, %v484
    %v486 = vsub.f32 1.0, %v485
    %v487 = vmul.f32 %v484, %v486
    %v488 = vadd.f32 %v484, %v487
    %vm489 = vweird.f32 %v482
    %vm490 = vweird.f32 %v484
    %vm491 = vmor %vm489, %vm490
    %v492 = vsel %vm491, %v484, %v488
    %v493 = vand.u32 2147483647, %v482
    %vm494 = vcmp.eq.f32.partialorder %v493, 8.507059e+37
    %v495 = vand.u32 %v482, 2147483648
    %v496 = vor.u32 1.1754944e-38, %v495
    %v497 = vsel %vm494, %v496, %v492
    %v498 = vmul.f32 1.0, %v497
    %v499 = vrcp.pop %v483
    %v500 = vmul.f32 %v483, %v499
    %v501 = vsub.f32 1.0, %v500
    %v502 = vmul.f32 %v499, %v501
    %v503 = vadd.f32 %v499, %v502
    %vm504 = vweird.f32 %v483
    %vm505 = vweird.f32 %v499
    %vm506 = vmor %vm504, %vm505
    %v507 = vsel %vm506, %v499, %v503
    %v508 = vand.u32 2147483647, %v483
    %vm509 = vcmp.eq.f32.partialorder %v508, 8.507059e+37
    %v510 = vand.u32 %v483, 2147483648
    %v511 = vor.u32 1.1754944e-38, %v510
    %v512 = vsel %vm509, %v511, %v507
    %v513 = vmul.f32 1.0, %v512
    %v514 = vtanh.pop %v474
    %v515 = vtanh.pop %v475
    %v518 = vrot.slane %v426, 7
    %v519 = vrot.slane %v427, 7
    %v522 = vmul.f32 %v498, %v518
    %v523 = vmul.f32 %v513, %v519
    %526 = vrot.lane.b32.xlu0 %v514, 32
    %v527 = vpop.permute.xlu0 %526
    %528 = vrot.lane.b32.xlu0 %v515, 32
    %v529 = vpop.permute.xlu0 %528
    %v532 = vmul.f32 %v498, %v527
    %v533 = vmul.f32 %v513, %v529
    %536 = vrot.lane.b32.xlu0 %v532, 32
    %v537 = vpop.permute.xlu0 %536
    %538 = vrot.lane.b32.xlu0 %v533, 32
    %v539 = vpop.permute.xlu0 %538
    %v542 = vadd.f32 %v522, %v537
    %v543 = vadd.f32 %v523, %v539
    %v544 = vtanh.pop %v542
    %v545 = vtanh.pop %v543
    %548 = vrot.lane.b32.xlu0 %v544, 32
    %v549 = vpop.permute.xlu0 %548
    %550 = vrot.lane.b32.xlu0 %v545, 32
    %v551 = vpop.permute.xlu0 %550
    %v554 = vmul.f32 %v498, %v549
    %v555 = vmul.f32 %v513, %v551
    %v558 = vrot.slane %v554, 3
    %v559 = vrot.slane %v555, 2
    %v560 = vsel %vm213, %v559, %v558
    %561 = vrot.lane.b32.xlu0 %v560, 64
    %v562 = vpop.permute.xlu0 %561
    %v563 = vsel %vm106, %v562, 0
    %565 = vmatpush.msra.mxu0 0.0
    %566 = vmatpush.msra.mxu0 0.0
    %567 = vmatpush.msra.mxu0 0.0
    %568 = vmatpush.msra.mxu0 0.0
    %569 = vmatpush.msra.mxu0 0.0
    %570 = vmatpush.msra.mxu0 0.0
    %571 = vmatpush.msra.mxu0 0.0
    %572 = vmatpush.msra.mxu0 0.0
    %573 = vmatpush.msra.mxu0 0.0
    %574 = vmatpush.msra.mxu0 0.0
    %575 = vmatpush.msra.mxu0 0.0
    %576 = vmatpush.msra.mxu0 0.0
    %577 = vmatpush.msra.mxu0 %v105
    %578 = vmatpush.msra.mxu0 %v104
    %579 = vmatpush.msra.mxu0 %v103
    %580 = vmatpush.msra.mxu0 %v102
    %581 = vmatmul.f32.gmra.mxu0 %v563
    %v582 = vpop.f32.mrf.mxu0
    %v583 = vadd.f32 0.0, %v582
    %584 = vdwg.mxu0
    %v586 = vrot.slane %v583, 4
    %v587 = vrot.slane %v583, 5
    %v590 = vadd.f32 %v97, %v586
    %v591 = vadd.f32 %v100, %v587
    %v592 = vxor.u32 %v590, 2147483648
    %v593 = vxor.u32 %v591, 2147483648
    %v594 = vmul.f32 %v592, 1.442695
    %v595 = vpow.pop %v594
    %v596 = vmul.f32 %v593, 1.442695
    %v597 = vpow.pop %v596
    %v598 = vadd.f32 %v595, 1.0
    %v599 = vadd.f32 %v597, 1.0
    %v600 = vrcp.pop %v598
    %v601 = vmul.f32 %v598, %v600
    %v602 = vsub.f32 1.0, %v601
    %v603 = vmul.f32 %v600, %v602
    %v604 = vadd.f32 %v600, %v603
    %vm605 = vweird.f32 %v598
    %vm606 = vweird.f32 %v600
    %vm607 = vmor %vm605, %vm606
    %v608 = vsel %vm607, %v600, %v604
    %v609 = vand.u32 2147483647, %v598
    %vm610 = vcmp.eq.f32.partialorder %v609, 8.507059e+37
    %v611 = vand.u32 %v598, 2147483648
    %v612 = vor.u32 1.1754944e-38, %v611
    %v613 = vsel %vm610, %v612, %v608
    %v614 = vmul.f32 1.0, %v613
    %v615 = vrcp.pop %v599
    %v616 = vmul.f32 %v599, %v615
    %v617 = vsub.f32 1.0, %v616
    %v618 = vmul.f32 %v615, %v617
    %v619 = vadd.f32 %v615, %v618
    %vm620 = vweird.f32 %v599
    %vm621 = vweird.f32 %v615
    %vm622 = vmor %vm620, %vm621
    %v623 = vsel %vm622, %v615, %v619
    %v624 = vand.u32 2147483647, %v599
    %vm625 = vcmp.eq.f32.partialorder %v624, 8.507059e+37
    %v626 = vand.u32 %v599, 2147483648
    %v627 = vor.u32 1.1754944e-38, %v626
    %v628 = vsel %vm625, %v627, %v623
    %v629 = vmul.f32 1.0, %v628
    %v630 = vtanh.pop %v590
    %v631 = vtanh.pop %v591
    %v634 = vrot.slane %v542, 7
    %v635 = vrot.slane %v543, 7
    %v638 = vmul.f32 %v614, %v634
    %v639 = vmul.f32 %v629, %v635
    %642 = vrot.lane.b32.xlu0 %v630, 32
    %v643 = vpop.permute.xlu0 %642
    %644 = vrot.lane.b32.xlu0 %v631, 32
    %v645 = vpop.permute.xlu0 %644
    %v648 = vmul.f32 %v614, %v643
    %v649 = vmul.f32 %v629, %v645
    %652 = vrot.lane.b32.xlu0 %v648, 32
    %v653 = vpop.permute.xlu0 %652
    %654 = vrot.lane.b32.xlu0 %v649, 32
    %v655 = vpop.permute.xlu0 %654
    %v658 = vadd.f32 %v638, %v653
    %v659 = vadd.f32 %v639, %v655
    %v660 = vtanh.pop %v658
    %v661 = vtanh.pop %v659
    %664 = vrot.lane.b32.xlu0 %v660, 32
    %v665 = vpop.permute.xlu0 %664
    %666 = vrot.lane.b32.xlu0 %v661, 32
    %v667 = vpop.permute.xlu0 %666
    %v670 = vmul.f32 %v614, %v665
    %v671 = vmul.f32 %v629, %v667
    %v674 = vrot.slane %v670, 4
    %v675 = vrot.slane %v671, 3
    %v676 = vsel %vm213, %v675, %v674
    %677 = vrot.lane.b32.xlu0 %v676, 64
    %v678 = vpop.permute.xlu0 %677
    %v679 = vsel %vm106, %v678, 0
    %681 = vmatpush.msra.mxu0 0.0
    %682 = vmatpush.msra.mxu0 0.0
    %683 = vmatpush.msra.mxu0 0.0
    %684 = vmatpush.msra.mxu0 0.0
    %685 = vmatpush.msra.mxu0 0.0
    %686 = vmatpush.msra.mxu0 0.0
    %687 = vmatpush.msra.mxu0 0.0
    %688 = vmatpush.msra.mxu0 0.0
    %689 = vmatpush.msra.mxu0 0.0
    %690 = vmatpush.msra.mxu0 0.0
    %691 = vmatpush.msra.mxu0 0.0
    %692 = vmatpush.msra.mxu0 0.0
    %693 = vmatpush.msra.mxu0 %v105
    %694 = vmatpush.msra.mxu0 %v104
    %695 = vmatpush.msra.mxu0 %v103
    %696 = vmatpush.msra.mxu0 %v102
    %697 = vmatmul.f32.gmra.mxu0 %v679
    %v698 = vpop.f32.mrf.mxu0
    %v699 = vadd.f32 0.0, %v698
    %700 = vdwg.mxu0
    %v702 = vrot.slane %v699, 3
    %v703 = vrot.slane %v699, 4
    %v706 = vadd.f32 %v97, %v702
    %v707 = vadd.f32 %v100, %v703
    %v708 = vxor.u32 %v706, 2147483648
    %v709 = vxor.u32 %v707, 2147483648
    %v710 = vmul.f32 %v708, 1.442695
    %v711 = vpow.pop %v710
    %v712 = vmul.f32 %v709, 1.442695
    %v713 = vpow.pop %v712
    %v714 = vadd.f32 %v711, 1.0
    %v715 = vadd.f32 %v713, 1.0
    %v716 = vrcp.pop %v714
    %v717 = vmul.f32 %v714, %v716
    %v718 = vsub.f32 1.0, %v717
    %v719 = vmul.f32 %v716, %v718
    %v720 = vadd.f32 %v716, %v719
    %vm721 = vweird.f32 %v714
    %vm722 = vweird.f32 %v716
    %vm723 = vmor %vm721, %vm722
    %v724 = vsel %vm723, %v716, %v720
    %v725 = vand.u32 2147483647, %v714
    %vm726 = vcmp.eq.f32.partialorder %v725, 8.507059e+37
    %v727 = vand.u32 %v714, 2147483648
    %v728 = vor.u32 1.1754944e-38, %v727
    %v729 = vsel %vm726, %v728, %v724
    %v730 = vmul.f32 1.0, %v729
    %v731 = vrcp.pop %v715
    %v732 = vmul.f32 %v715, %v731
    %v733 = vsub.f32 1.0, %v732
    %v734 = vmul.f32 %v731, %v733
    %v735 = vadd.f32 %v731, %v734
    %vm736 = vweird.f32 %v715
    %vm737 = vweird.f32 %v731
    %vm738 = vmor %vm736, %vm737
    %v739 = vsel %vm738, %v731, %v735
    %v740 = vand.u32 2147483647, %v715
    %vm741 = vcmp.eq.f32.partialorder %v740, 8.507059e+37
    %v742 = vand.u32 %v715, 2147483648
    %v743 = vor.u32 1.1754944e-38, %v742
    %v744 = vsel %vm741, %v743, %v739
    %v745 = vmul.f32 1.0, %v744
    %v746 = vtanh.pop %v706
    %v747 = vtanh.pop %v707
    %v750 = vrot.slane %v658, 7
    %v751 = vrot.slane %v659, 7
    %v754 = vmul.f32 %v730, %v750
    %v755 = vmul.f32 %v745, %v751
    %758 = vrot.lane.b32.xlu0 %v746, 32
    %v759 = vpop.permute.xlu0 %758
    %760 = vrot.lane.b32.xlu0 %v747, 32
    %v761 = vpop.permute.xlu0 %760
    %v764 = vmul.f32 %v730, %v759
    %v765 = vmul.f32 %v745, %v761
    %768 = vrot.lane.b32.xlu0 %v764, 32
    %v769 = vpop.permute.xlu0 %768
    %770 = vrot.lane.b32.xlu0 %v765, 32
    %v771 = vpop.permute.xlu0 %770
    %v774 = vadd.f32 %v754, %v769
    %v775 = vadd.f32 %v755, %v771
    %v776 = vtanh.pop %v774
    %v777 = vtanh.pop %v775
    %780 = vrot.lane.b32.xlu0 %v776, 32
    %v781 = vpop.permute.xlu0 %780
    %782 = vrot.lane.b32.xlu0 %v777, 32
    %v783 = vpop.permute.xlu0 %782
    %v786 = vmul.f32 %v730, %v781
    %v787 = vmul.f32 %v745, %v783
    %v790 = vrot.slane %v786, 5
    %v791 = vrot.slane %v787, 4
    %v792 = vsel %vm213, %v791, %v790
    %793 = vrot.lane.b32.xlu0 %v792, 64
    %v794 = vpop.permute.xlu0 %793
    %v795 = vsel %vm106, %v794, 0
    %797 = vmatpush.msra.mxu0 0.0
    %798 = vmatpush.msra.mxu0 0.0
    %799 = vmatpush.msra.mxu0 0.0
    %800 = vmatpush.msra.mxu0 0.0
    %801 = vmatpush.msra.mxu0 0.0
    %802 = vmatpush.msra.mxu0 0.0
    %803 = vmatpush.msra.mxu0 0.0
    %804 = vmatpush.msra.mxu0 0.0
    %805 = vmatpush.msra.mxu0 0.0
    %806 = vmatpush.msra.mxu0 0.0
    %807 = vmatpush.msra.mxu0 0.0
    %808 = vmatpush.msra.mxu0 0.0
    %809 = vmatpush.msra.mxu0 %v105
    %810 = vmatpush.msra.mxu0 %v104
    %811 = vmatpush.msra.mxu0 %v103
    %812 = vmatpush.msra.mxu0 %v102
    %813 = vmatmul.f32.gmra.mxu0 %v795
    %v814 = vpop.f32.mrf.mxu0
    %v815 = vadd.f32 0.0, %v814
    %816 = vdwg.mxu0
    %v818 = vrot.slane %v815, 2
    %v819 = vrot.slane %v815, 3
    %v822 = vadd.f32 %v97, %v818
    %v823 = vadd.f32 %v100, %v819
    %v824 = vxor.u32 %v822, 2147483648
    %v825 = vxor.u32 %v823, 2147483648
    %v826 = vmul.f32 %v824, 1.442695
    %v827 = vpow.pop %v826
    %v828 = vmul.f32 %v825, 1.442695
    %v829 = vpow.pop %v828
    %v830 = vadd.f32 %v827, 1.0
    %v831 = vadd.f32 %v829, 1.0
    %v832 = vrcp.pop %v830
    %v833 = vmul.f32 %v830, %v832
    %v834 = vsub.f32 1.0, %v833
    %v835 = vmul.f32 %v832, %v834
    %v836 = vadd.f32 %v832, %v835
    %vm837 = vweird.f32 %v830
    %vm838 = vweird.f32 %v832
    %vm839 = vmor %vm837, %vm838
    %v840 = vsel %vm839, %v832, %v836
    %v841 = vand.u32 2147483647, %v830
    %vm842 = vcmp.eq.f32.partialorder %v841, 8.507059e+37
    %v843 = vand.u32 %v830, 2147483648
    %v844 = vor.u32 1.1754944e-38, %v843
    %v845 = vsel %vm842, %v844, %v840
    %v846 = vmul.f32 1.0, %v845
    %v847 = vrcp.pop %v831
    %v848 = vmul.f32 %v831, %v847
    %v849 = vsub.f32 1.0, %v848
    %v850 = vmul.f32 %v847, %v849
    %v851 = vadd.f32 %v847, %v850
    %vm852 = vweird.f32 %v831
    %vm853 = vweird.f32 %v847
    %vm854 = vmor %vm852, %vm853
    %v855 = vsel %vm854, %v847, %v851
    %v856 = vand.u32 2147483647, %v831
    %vm857 = vcmp.eq.f32.partialorder %v856, 8.507059e+37
    %v858 = vand.u32 %v831, 2147483648
    %v859 = vor.u32 1.1754944e-38, %v858
    %v860 = vsel %vm857, %v859, %v855
    %v861 = vmul.f32 1.0, %v860
    %v862 = vtanh.pop %v822
    %v863 = vtanh.pop %v823
    %v866 = vrot.slane %v774, 7
    %v867 = vrot.slane %v775, 7
    %v870 = vmul.f32 %v846, %v866
    %v871 = vmul.f32 %v861, %v867
    %874 = vrot.lane.b32.xlu0 %v862, 32
    %v875 = vpop.permute.xlu0 %874
    %876 = vrot.lane.b32.xlu0 %v863, 32
    %v877 = vpop.permute.xlu0 %876
    %v880 = vmul.f32 %v846, %v875
    %v881 = vmul.f32 %v861, %v877
    %884 = vrot.lane.b32.xlu0 %v880, 32
    %v885 = vpop.permute.xlu0 %884
    %886 = vrot.lane.b32.xlu0 %v881, 32
    %v887 = vpop.permute.xlu0 %886
    %v890 = vadd.f32 %v870, %v885
    %v891 = vadd.f32 %v871, %v887
    %v892 = vtanh.pop %v890
    %v893 = vtanh.pop %v891
    %896 = vrot.lane.b32.xlu0 %v892, 32
    %v897 = vpop.permute.xlu0 %896
    %898 = vrot.lane.b32.xlu0 %v893, 32
    %v899 = vpop.permute.xlu0 %898
    %v902 = vmul.f32 %v846, %v897
    %v903 = vmul.f32 %v861, %v899
    %v906 = vrot.slane %v902, 6
    %v907 = vrot.slane %v903, 5
    %v908 = vsel %vm213, %v907, %v906
    %909 = vrot.lane.b32.xlu0 %v908, 64
    %v910 = vpop.permute.xlu0 %909
    %v911 = vsel %vm106, %v910, 0
    %913 = vmatpush.msra.mxu0 0.0
    %914 = vmatpush.msra.mxu0 0.0
    %915 = vmatpush.msra.mxu0 0.0
    %916 = vmatpush.msra.mxu0 0.0
    %917 = vmatpush.msra.mxu0 0.0
    %918 = vmatpush.msra.mxu0 0.0
    %919 = vmatpush.msra.mxu0 0.0
    %920 = vmatpush.msra.mxu0 0.0
    %921 = vmatpush.msra.mxu0 0.0
    %922 = vmatpush.msra.mxu0 0.0
    %923 = vmatpush.msra.mxu0 0.0
    %924 = vmatpush.msra.mxu0 0.0
    %925 = vmatpush.msra.mxu0 %v105
    %926 = vmatpush.msra.mxu0 %v104
    %927 = vmatpush.msra.mxu0 %v103
    %928 = vmatpush.msra.mxu0 %v102
    %929 = vmatmul.f32.gmra.mxu0 %v911
    %v930 = vpop.f32.mrf.mxu0
    %v931 = vadd.f32 0.0, %v930
    %932 = vdwg.mxu0
    %v934 = vrot.slane %v931, 1
    %v935 = vrot.slane %v931, 2
    %v938 = vadd.f32 %v97, %v934
    %v939 = vadd.f32 %v100, %v935
    %v940 = vxor.u32 %v938, 2147483648
    %v941 = vxor.u32 %v939, 2147483648
    %v942 = vmul.f32 %v940, 1.442695
    %v943 = vpow.pop %v942
    %v944 = vmul.f32 %v941, 1.442695
    %v945 = vpow.pop %v944
    %v946 = vadd.f32 %v943, 1.0
    %v947 = vadd.f32 %v945, 1.0
    %v948 = vrcp.pop %v946
    %v949 = vmul.f32 %v946, %v948
    %v950 = vsub.f32 1.0, %v949
    %v951 = vmul.f32 %v948, %v950
    %v952 = vadd.f32 %v948, %v951
    %vm953 = vweird.f32 %v946
    %vm954 = vweird.f32 %v948
    %vm955 = vmor %vm953, %vm954
    %v956 = vsel %vm955, %v948, %v952
    %v957 = vand.u32 2147483647, %v946
    %vm958 = vcmp.eq.f32.partialorder %v957, 8.507059e+37
    %v959 = vand.u32 %v946, 2147483648
    %v960 = vor.u32 1.1754944e-38, %v959
    %v961 = vsel %vm958, %v960, %v956
    %v962 = vmul.f32 1.0, %v961
    %v963 = vrcp.pop %v947
    %v964 = vmul.f32 %v947, %v963
    %v965 = vsub.f32 1.0, %v964
    %v966 = vmul.f32 %v963, %v965
    %v967 = vadd.f32 %v963, %v966
    %vm968 = vweird.f32 %v947
    %vm969 = vweird.f32 %v963
    %vm970 = vmor %vm968, %vm969
    %v971 = vsel %vm970, %v963, %v967
    %v972 = vand.u32 2147483647, %v947
    %vm973 = vcmp.eq.f32.partialorder %v972, 8.507059e+37
    %v974 = vand.u32 %v947, 2147483648
    %v975 = vor.u32 1.1754944e-38, %v974
    %v976 = vsel %vm973, %v975, %v971
    %v977 = vmul.f32 1.0, %v976
    %v978 = vtanh.pop %v938
    %v979 = vtanh.pop %v939
    %v982 = vrot.slane %v890, 7
    %v983 = vrot.slane %v891, 7
    %v986 = vmul.f32 %v962, %v982
    %v987 = vmul.f32 %v977, %v983
    %990 = vrot.lane.b32.xlu0 %v978, 32
    %v991 = vpop.permute.xlu0 %990
    %992 = vrot.lane.b32.xlu0 %v979, 32
    %v993 = vpop.permute.xlu0 %992
    %v996 = vmul.f32 %v962, %v991
    %v997 = vmul.f32 %v977, %v993
    %1000 = vrot.lane.b32.xlu0 %v996, 32
    %v1001 = vpop.permute.xlu0 %1000
    %1002 = vrot.lane.b32.xlu0 %v997, 32
    %v1003 = vpop.permute.xlu0 %1002
    %v1006 = vadd.f32 %v986, %v1001
    %v1007 = vadd.f32 %v987, %v1003
    %v1008 = vtanh.pop %v1006
    %v1009 = vtanh.pop %v1007
    %1012 = vrot.lane.b32.xlu0 %v1008, 32
    %v1013 = vpop.permute.xlu0 %1012
    %1014 = vrot.lane.b32.xlu0 %v1009, 32
    %v1015 = vpop.permute.xlu0 %1014
    %v1018 = vmul.f32 %v962, %v1013
    %v1019 = vmul.f32 %v977, %v1015
    %v1020 = vld [vmem:[#allocation2] sm:$0xff]
    %v1021 = vld [vmem:[#allocation2 + $0x8] sm:$0xff]
    %v1022 = vld [vmem:[#allocation2 + $0x10] sm:$0xff]
    %v1023 = vld [vmem:[#allocation2 + $0x18] sm:$0xff]
    %v1024 = vld [vmem:[%s6] sm:$0x1]
    %v1026 = vperm.slane %v1024, 0
    %v1030 = vrot.slane %v1018, 7
    %v1031 = vrot.slane %v1019, 6
    %v1032 = vsel %vm213, %v1031, %v1030
    %1033 = vrot.lane.b32.xlu0 %v1032, 64
    %v1034 = vpop.permute.xlu0 %1033
    %v1035 = vsel %vm106, %v1034, 0
    %1037 = vmatpush.msra.mxu0 0.0
    %1038 = vmatpush.msra.mxu0 0.0
    %1039 = vmatpush.msra.mxu0 0.0
    %1040 = vmatpush.msra.mxu0 0.0
    %1041 = vmatpush.msra.mxu0 0.0
    %1042 = vmatpush.msra.mxu0 0.0
    %1043 = vmatpush.msra.mxu0 0.0
    %1044 = vmatpush.msra.mxu0 0.0
    %1045 = vmatpush.msra.mxu0 0.0
    %1046 = vmatpush.msra.mxu0 0.0
    %1047 = vmatpush.msra.mxu0 0.0
    %1048 = vmatpush.msra.mxu0 0.0
    %1049 = vmatpush.msra.mxu0 %v1023
    %1050 = vmatpush.msra.mxu0 %v1022
    %1051 = vmatpush.msra.mxu0 %v1021
    %1052 = vmatpush.msra.mxu0 %v1020
    %1053 = vmatmul.f32.gmra.mxu0 %v1035
    %v1054 = vpop.f32.mrf.mxu0
    %v1055 = vadd.f32 %v1026, %v1054
    %1056 = vdwg.mxu0
    %v1057 = vmul.f32 %v1055, 0.5
    %v1058 = vmul.f32 %v1057, 1.442695
    %v1059 = vpow.pop %v1058
    %v1060 = vld [vmem:[%s1] sm:$0x3]
    %1062 = vrot.lane.b32.xlu0 %v1060, 32
    %v1063 = vpop.permute.xlu0 %1062
    %v1065 = vmul.f32 %v1059, %v1063
    %1067 = vrot.lane.b32.xlu0 %v1065, 96
    %v1068 = vpop.permute.xlu0 %1067
    %v1070 = vadd.f32 %v1055, %v1068
    %v1071 = vld [vmem:[%s7] sm:$0xff]
    %v1072 = vld [vmem:[%s7 + $0x8] sm:$0xff]
    %v1073 = vld [vmem:[%s7 + $0x10] sm:$0xff]
    %v1074 = vld [vmem:[%s7 + $0x18] sm:$0xff]
    %v1075 = vld [vmem:[%s8] sm:$0x1]
    %v1077 = vperm.slane %v1075, 0
    %v1080 = vsel %vm106, %v1070, 0
    %1082 = vmatpush.msra.mxu0 0.0
    %1083 = vmatpush.msra.mxu0 0.0
    %1084 = vmatpush.msra.mxu0 0.0
    %1085 = vmatpush.msra.mxu0 0.0
    %1086 = vmatpush.msra.mxu0 0.0
    %1087 = vmatpush.msra.mxu0 0.0
    %1088 = vmatpush.msra.mxu0 0.0
    %1089 = vmatpush.msra.mxu0 0.0
    %1090 = vmatpush.msra.mxu0 0.0
    %1091 = vmatpush.msra.mxu0 0.0
    %1092 = vmatpush.msra.mxu0 0.0
    %1093 = vmatpush.msra.mxu0 0.0
    %1094 = vmatpush.msra.mxu0 %v1074
    %1095 = vmatpush.msra.mxu0 %v1073
    %1096 = vmatpush.msra.mxu0 %v1072
    %1097 = vmatpush.msra.mxu0 %v1071
    %1098 = vmatmul.f32.gmra.mxu0 %v1080
    %v1099 = vpop.f32.mrf.mxu0
    %v1100 = vadd.f32 %v1077, %v1099
    %1101 = vdwg.mxu0
    %v1102 = vld [vmem:[%s11] sm:$0xf]
    %v1103 = vld [vmem:[%s12] sm:$0x1]
    %v1104 = vld [vmem:[%s9] sm:$0xf]
    %v1105 = vld [vmem:[%s10] sm:$0x1]
    %v1107 = vperm.slane %v1105, 0
    %v1110 = vsel %vm68, %v1100, 0
    %v1113 = vsel %vm75, %v1104, 0
    %1115 = vmatpush.msra.mxu0 0.0
    %1116 = vmatpush.msra.mxu0 0.0
    %1117 = vmatpush.msra.mxu0 0.0
    %1118 = vmatpush.msra.mxu0 0.0
    %1119 = vmatpush.msra.mxu0 0.0
    %1120 = vmatpush.msra.mxu0 0.0
    %1121 = vmatpush.msra.mxu0 0.0
    %1122 = vmatpush.msra.mxu0 0.0
    %1123 = vmatpush.msra.mxu0 0.0
    %1124 = vmatpush.msra.mxu0 0.0
    %1125 = vmatpush.msra.mxu0 0.0
    %1126 = vmatpush.msra.mxu0 0.0
    %1127 = vmatpush.msra.mxu0 0.0
    %1128 = vmatpush.msra.mxu0 0.0
    %1129 = vmatpush.msra.mxu0 0.0
    %1130 = vmatpush.msra.mxu0 %v1113
    %1131 = vmatmul.f32.gmra.mxu0 %v1110
    %v1132 = vpop.f32.mrf.mxu0
    %v1133 = vadd.f32 %v1107, %v1132
    %1134 = vdwg.mxu0
    %v1135 = vxor.u32 %v1133, 2147483648
    %v1136 = vmul.f32 %v1135, 1.442695
    %v1137 = vpow.pop %v1136
    %v1138 = vadd.f32 %v1137, 1.0
    %v1139 = vrcp.pop %v1138
    %v1140 = vmul.f32 %v1138, %v1139
    %v1141 = vsub.f32 1.0, %v1140
    %v1142 = vmul.f32 %v1139, %v1141
    %v1143 = vadd.f32 %v1139, %v1142
    %vm1144 = vweird.f32 %v1138
    %vm1145 = vweird.f32 %v1139
    %vm1146 = vmor %vm1144, %vm1145
    %v1147 = vsel %vm1146, %v1139, %v1143
    %v1148 = vand.u32 2147483647, %v1138
    %vm1149 = vcmp.eq.f32.partialorder %v1148, 8.507059e+37
    %v1150 = vand.u32 %v1138, 2147483648
    %v1151 = vor.u32 1.1754944e-38, %v1150
    %v1152 = vsel %vm1149, %v1151, %v1147
    %v1153 = vmul.f32 1.0, %v1152
    %v1154 = vtanh.pop %v1133
    %v1155 = vmul.f32 %v1153, 0.0
    %1157 = vrot.lane.b32.xlu0 %v1154, 116
    %v1158 = vpop.permute.xlu0 %1157
    %v1160 = vmul.f32 %v1153, %v1158
    %1162 = vrot.lane.b32.xlu0 %v1160, 4
    %v1163 = vpop.permute.xlu0 %1162
    %v1165 = vadd.f32 %v1155, %v1163
    %v1166 = vtanh.pop %v1165
    %1168 = vrot.lane.b32.xlu0 %v1166, 4
    %v1169 = vpop.permute.xlu0 %1168
    %v1171 = vmul.f32 %v1153, %v1169
    %v1173 = vperm.slane %v1103, 0
    %1176 = vrot.lane.b32.xlu0 %v1171, 120
    %v1177 = vpop.permute.xlu0 %1176
    %v1178 = vsel %vm68, %v1177, 0
    %v1181 = vsel %vm75, %v1102, 0
    %1183 = vmatpush.msra.mxu0 0.0
    %1184 = vmatpush.msra.mxu0 0.0
    %1185 = vmatpush.msra.mxu0 0.0
    %1186 = vmatpush.msra.mxu0 0.0
    %1187 = vmatpush.msra.mxu0 0.0
    %1188 = vmatpush.msra.mxu0 0.0
    %1189 = vmatpush.msra.mxu0 0.0
    %1190 = vmatpush.msra.mxu0 0.0
    %1191 = vmatpush.msra.mxu0 0.0
    %1192 = vmatpush.msra.mxu0 0.0
    %1193 = vmatpush.msra.mxu0 0.0
    %1194 = vmatpush.msra.mxu0 0.0
    %1195 = vmatpush.msra.mxu0 0.0
    %1196 = vmatpush.msra.mxu0 0.0
    %1197 = vmatpush.msra.mxu0 0.0
    %1198 = vmatpush.msra.mxu0 %v1181
    %1199 = vmatmul.f32.gmra.mxu0 %v1178
    %v1200 = vpop.f32.mrf.mxu0
    %v1201 = vadd.f32 %v1173, %v1200
    %1202 = vdwg.mxu0
    %v1203 = vxor.u32 %v1201, 2147483648
    %v1204 = vmul.f32 %v1203, 1.442695
    %v1205 = vpow.pop %v1204
    %v1206 = vadd.f32 %v1205, 1.0
    %v1207 = vrcp.pop %v1206
    %v1208 = vmul.f32 %v1206, %v1207
    %v1209 = vsub.f32 1.0, %v1208
    %v1210 = vmul.f32 %v1207, %v1209
    %v1211 = vadd.f32 %v1207, %v1210
    %vm1212 = vweird.f32 %v1206
    %vm1213 = vweird.f32 %v1207
    %vm1214 = vmor %vm1212, %vm1213
    %v1215 = vsel %vm1214, %v1207, %v1211
    %v1216 = vand.u32 2147483647, %v1206
    %vm1217 = vcmp.eq.f32.partialorder %v1216, 8.507059e+37
    %v1218 = vand.u32 %v1206, 2147483648
    %v1219 = vor.u32 1.1754944e-38, %v1218
    %v1220 = vsel %vm1217, %v1219, %v1215
    %v1221 = vmul.f32 1.0, %v1220
    %v1222 = vtanh.pop %v1201
    %v1223 = vmul.f32 %v1221, %v1165
    %1225 = vrot.lane.b32.xlu0 %v1222, 116
    %v1226 = vpop.permute.xlu0 %1225
    %v1228 = vmul.f32 %v1221, %v1226
    %1230 = vrot.lane.b32.xlu0 %v1228, 4
    %v1231 = vpop.permute.xlu0 %1230
    %v1233 = vadd.f32 %v1223, %v1231
    %v1234 = vtanh.pop %v1233
    %1236 = vrot.lane.b32.xlu0 %v1234, 4
    %v1237 = vpop.permute.xlu0 %1236
    %v1239 = vmul.f32 %v1221, %v1237
    %1241 = vrot.lane.b32.xlu0 %v1239, 120
    %v1242 = vpop.permute.xlu0 %1241
    %v1243 = vsel %vm68, %v1242, 0
    %1245 = vmatpush.msra.mxu0 0.0
    %1246 = vmatpush.msra.mxu0 0.0
    %1247 = vmatpush.msra.mxu0 0.0
    %1248 = vmatpush.msra.mxu0 0.0
    %1249 = vmatpush.msra.mxu0 0.0
    %1250 = vmatpush.msra.mxu0 0.0
    %1251 = vmatpush.msra.mxu0 0.0
    %1252 = vmatpush.msra.mxu0 0.0
    %1253 = vmatpush.msra.mxu0 0.0
    %1254 = vmatpush.msra.mxu0 0.0
    %1255 = vmatpush.msra.mxu0 0.0
    %1256 = vmatpush.msra.mxu0 0.0
    %1257 = vmatpush.msra.mxu0 0.0
    %1258 = vmatpush.msra.mxu0 0.0
    %1259 = vmatpush.msra.mxu0 0.0
    %1260 = vmatpush.msra.mxu0 %v1181
    %1261 = vmatmul.f32.gmra.mxu0 %v1243
    %v1262 = vpop.f32.mrf.mxu0
    %v1263 = vadd.f32 %v1173, %v1262
    %1264 = vdwg.mxu0
    %v1265 = vxor.u32 %v1263, 2147483648
    %v1266 = vmul.f32 %v1265, 1.442695
    %v1267 = vpow.pop %v1266
    %v1268 = vadd.f32 %v1267, 1.0
    %v1269 = vrcp.pop %v1268
    %v1270 = vmul.f32 %v1268, %v1269
    %v1271 = vsub.f32 1.0, %v1270
    %v1272 = vmul.f32 %v1269, %v1271
    %v1273 = vadd.f32 %v1269, %v1272
    %vm1274 = vweird.f32 %v1268
    %vm1275 = vweird.f32 %v1269
    %vm1276 = vmor %vm1274, %vm1275
    %v1277 = vsel %vm1276, %v1269, %v1273
    %v1278 = vand.u32 2147483647, %v1268
    %vm1279 = vcmp.eq.f32.partialorder %v1278, 8.507059e+37
    %v1280 = vand.u32 %v1268, 2147483648
    %v1281 = vor.u32 1.1754944e-38, %v1280
    %v1282 = vsel %vm1279, %v1281, %v1277
    %v1283 = vmul.f32 1.0, %v1282
    %v1284 = vtanh.pop %v1263
    %v1285 = vmul.f32 %v1283, %v1233
    %1287 = vrot.lane.b32.xlu0 %v1284, 116
    %v1288 = vpop.permute.xlu0 %1287
    %v1290 = vmul.f32 %v1283, %v1288
    %1292 = vrot.lane.b32.xlu0 %v1290, 4
    %v1293 = vpop.permute.xlu0 %1292
    %v1295 = vadd.f32 %v1285, %v1293
    %v1296 = vtanh.pop %v1295
    %1298 = vrot.lane.b32.xlu0 %v1296, 4
    %v1299 = vpop.permute.xlu0 %1298
    %v1301 = vmul.f32 %v1283, %v1299
    %1303 = vrot.lane.b32.xlu0 %v1301, 120
    %v1304 = vpop.permute.xlu0 %1303
    %v1305 = vsel %vm68, %v1304, 0
    %1307 = vmatpush.msra.mxu0 0.0
    %1308 = vmatpush.msra.mxu0 0.0
    %1309 = vmatpush.msra.mxu0 0.0
    %1310 = vmatpush.msra.mxu0 0.0
    %1311 = vmatpush.msra.mxu0 0.0
    %1312 = vmatpush.msra.mxu0 0.0
    %1313 = vmatpush.msra.mxu0 0.0
    %1314 = vmatpush.msra.mxu0 0.0
    %1315 = vmatpush.msra.mxu0 0.0
    %1316 = vmatpush.msra.mxu0 0.0
    %1317 = vmatpush.msra.mxu0 0.0
    %1318 = vmatpush.msra.mxu0 0.0
    %1319 = vmatpush.msra.mxu0 0.0
    %1320 = vmatpush.msra.mxu0 0.0
    %1321 = vmatpush.msra.mxu0 0.0
    %1322 = vmatpush.msra.mxu0 %v1181
    %1323 = vmatmul.f32.gmra.mxu0 %v1305
    %v1324 = vpop.f32.mrf.mxu0
    %v1325 = vadd.f32 %v1173, %v1324
    %1326 = vdwg.mxu0
    %v1327 = vxor.u32 %v1325, 2147483648
    %v1328 = vmul.f32 %v1327, 1.442695
    %v1329 = vpow.pop %v1328
    %v1330 = vadd.f32 %v1329, 1.0
    %v1331 = vrcp.pop %v1330
    %v1332 = vmul.f32 %v1330, %v1331
    %v1333 = vsub.f32 1.0, %v1332
    %v1334 = vmul.f32 %v1331, %v1333
    %v1335 = vadd.f32 %v1331, %v1334
    %vm1336 = vweird.f32 %v1330
    %vm1337 = vweird.f32 %v1331
    %vm1338 = vmor %vm1336, %vm1337
    %v1339 = vsel %vm1338, %v1331, %v1335
    %v1340 = vand.u32 2147483647, %v1330
    %vm1341 = vcmp.eq.f32.partialorder %v1340, 8.507059e+37
    %v1342 = vand.u32 %v1330, 2147483648
    %v1343 = vor.u32 1.1754944e-38, %v1342
    %v1344 = vsel %vm1341, %v1343, %v1339
    %v1345 = vmul.f32 1.0, %v1344
    %v1346 = vtanh.pop %v1325
    %v1347 = vmul.f32 %v1345, %v1295
    %1349 = vrot.lane.b32.xlu0 %v1346, 116
    %v1350 = vpop.permute.xlu0 %1349
    %v1352 = vmul.f32 %v1345, %v1350
    %1354 = vrot.lane.b32.xlu0 %v1352, 4
    %v1355 = vpop.permute.xlu0 %1354
    %v1357 = vadd.f32 %v1347, %v1355
    %v1358 = vtanh.pop %v1357
    %1360 = vrot.lane.b32.xlu0 %v1358, 4
    %v1361 = vpop.permute.xlu0 %1360
    %v1363 = vmul.f32 %v1345, %v1361
    %1365 = vrot.lane.b32.xlu0 %v1363, 120
    %v1366 = vpop.permute.xlu0 %1365
    %v1367 = vsel %vm68, %v1366, 0
    %1369 = vmatpush.msra.mxu0 0.0
    %1370 = vmatpush.msra.mxu0 0.0
    %1371 = vmatpush.msra.mxu0 0.0
    %1372 = vmatpush.msra.mxu0 0.0
    %1373 = vmatpush.msra.mxu0 0.0
    %1374 = vmatpush.msra.mxu0 0.0
    %1375 = vmatpush.msra.mxu0 0.0
    %1376 = vmatpush.msra.mxu0 0.0
    %1377 = vmatpush.msra.mxu0 0.0
    %1378 = vmatpush.msra.mxu0 0.0
    %1379 = vmatpush.msra.mxu0 0.0
    %1380 = vmatpush.msra.mxu0 0.0
    %1381 = vmatpush.msra.mxu0 0.0
    %1382 = vmatpush.msra.mxu0 0.0
    %1383 = vmatpush.msra.mxu0 0.0
    %1384 = vmatpush.msra.mxu0 %v1181
    %1385 = vmatmul.f32.gmra.mxu0 %v1367
    %v1386 = vpop.f32.mrf.mxu0
    %v1387 = vadd.f32 %v1173, %v1386
    %1388 = vdwg.mxu0
    %v1389 = vxor.u32 %v1387, 2147483648
    %v1390 = vmul.f32 %v1389, 1.442695
    %v1391 = vpow.pop %v1390
    %v1392 = vadd.f32 %v1391, 1.0
    %v1393 = vrcp.pop %v1392
    %v1394 = vmul.f32 %v1392, %v1393
    %v1395 = vsub.f32 1.0, %v1394
    %v1396 = vmul.f32 %v1393, %v1395
    %v1397 = vadd.f32 %v1393, %v1396
    %vm1398 = vweird.f32 %v1392
    %vm1399 = vweird.f32 %v1393
    %vm1400 = vmor %vm1398, %vm1399
    %v1401 = vsel %vm1400, %v1393, %v1397
    %v1402 = vand.u32 2147483647, %v1392
    %vm1403 = vcmp.eq.f32.partialorder %v1402, 8.507059e+37
    %v1404 = vand.u32 %v1392, 2147483648
    %v1405 = vor.u32 1.1754944e-38, %v1404
    %v1406 = vsel %vm1403, %v1405, %v1401
    %v1407 = vmul.f32 1.0, %v1406
    %v1408 = vtanh.pop %v1387
    %v1409 = vmul.f32 %v1407, %v1357
    %1411 = vrot.lane.b32.xlu0 %v1408, 116
    %v1412 = vpop.permute.xlu0 %1411
    %v1414 = vmul.f32 %v1407, %v1412
    %1416 = vrot.lane.b32.xlu0 %v1414, 4
    %v1417 = vpop.permute.xlu0 %1416
    %v1419 = vadd.f32 %v1409, %v1417
    %v1420 = vtanh.pop %v1419
    %1422 = vrot.lane.b32.xlu0 %v1420, 4
    %v1423 = vpop.permute.xlu0 %1422
    %v1425 = vmul.f32 %v1407, %v1423
    %1427 = vrot.lane.b32.xlu0 %v1425, 120
    %v1428 = vpop.permute.xlu0 %1427
    %v1429 = vsel %vm68, %v1428, 0
    %1431 = vmatpush.msra.mxu0 0.0
    %1432 = vmatpush.msra.mxu0 0.0
    %1433 = vmatpush.msra.mxu0 0.0
    %1434 = vmatpush.msra.mxu0 0.0
    %1435 = vmatpush.msra.mxu0 0.0
    %1436 = vmatpush.msra.mxu0 0.0
    %1437 = vmatpush.msra.mxu0 0.0
    %1438 = vmatpush.msra.mxu0 0.0
    %1439 = vmatpush.msra.mxu0 0.0
    %1440 = vmatpush.msra.mxu0 0.0
    %1441 = vmatpush.msra.mxu0 0.0
    %1442 = vmatpush.msra.mxu0 0.0
    %1443 = vmatpush.msra.mxu0 0.0
    %1444 = vmatpush.msra.mxu0 0.0
    %1445 = vmatpush.msra.mxu0 0.0
    %1446 = vmatpush.msra.mxu0 %v1181
    %1447 = vmatmul.f32.gmra.mxu0 %v1429
    %v1448 = vpop.f32.mrf.mxu0
    %v1449 = vadd.f32 %v1173, %v1448
    %1450 = vdwg.mxu0
    %v1451 = vxor.u32 %v1449, 2147483648
    %v1452 = vmul.f32 %v1451, 1.442695
    %v1453 = vpow.pop %v1452
    %v1454 = vadd.f32 %v1453, 1.0
    %v1455 = vrcp.pop %v1454
    %v1456 = vmul.f32 %v1454, %v1455
    %v1457 = vsub.f32 1.0, %v1456
    %v1458 = vmul.f32 %v1455, %v1457
    %v1459 = vadd.f32 %v1455, %v1458
    %vm1460 = vweird.f32 %v1454
    %vm1461 = vweird.f32 %v1455
    %vm1462 = vmor %vm1460, %vm1461
    %v1463 = vsel %vm1462, %v1455, %v1459
    %v1464 = vand.u32 2147483647, %v1454
    %vm1465 = vcmp.eq.f32.partialorder %v1464, 8.507059e+37
    %v1466 = vand.u32 %v1454, 2147483648
    %v1467 = vor.u32 1.1754944e-38, %v1466
    %v1468 = vsel %vm1465, %v1467, %v1463
    %v1469 = vmul.f32 1.0, %v1468
    %v1470 = vtanh.pop %v1449
    %v1471 = vmul.f32 %v1469, %v1419
    %1473 = vrot.lane.b32.xlu0 %v1470, 116
    %v1474 = vpop.permute.xlu0 %1473
    %v1476 = vmul.f32 %v1469, %v1474
    %1478 = vrot.lane.b32.xlu0 %v1476, 4
    %v1479 = vpop.permute.xlu0 %1478
    %v1481 = vadd.f32 %v1471, %v1479
    %v1482 = vtanh.pop %v1481
    %1484 = vrot.lane.b32.xlu0 %v1482, 4
    %v1485 = vpop.permute.xlu0 %1484
    %v1487 = vmul.f32 %v1469, %v1485
    %1489 = vrot.lane.b32.xlu0 %v1487, 120
    %v1490 = vpop.permute.xlu0 %1489
    %v1491 = vsel %vm68, %v1490, 0
    %1493 = vmatpush.msra.mxu0 0.0
    %1494 = vmatpush.msra.mxu0 0.0
    %1495 = vmatpush.msra.mxu0 0.0
    %1496 = vmatpush.msra.mxu0 0.0
    %1497 = vmatpush.msra.mxu0 0.0
    %1498 = vmatpush.msra.mxu0 0.0
    %1499 = vmatpush.msra.mxu0 0.0
    %1500 = vmatpush.msra.mxu0 0.0
    %1501 = vmatpush.msra.mxu0 0.0
    %1502 = vmatpush.msra.mxu0 0.0
    %1503 = vmatpush.msra.mxu0 0.0
    %1504 = vmatpush.msra.mxu0 0.0
    %1505 = vmatpush.msra.mxu0 0.0
    %1506 = vmatpush.msra.mxu0 0.0
    %1507 = vmatpush.msra.mxu0 0.0
    %1508 = vmatpush.msra.mxu0 %v1181
    %1509 = vmatmul.f32.gmra.mxu0 %v1491
    %v1510 = vpop.f32.mrf.mxu0
    %v1511 = vadd.f32 %v1173, %v1510
    %1512 = vdwg.mxu0
    %v1513 = vxor.u32 %v1511, 2147483648
    %v1514 = vmul.f32 %v1513, 1.442695
    %v1515 = vpow.pop %v1514
    %v1516 = vadd.f32 %v1515, 1.0
    %v1517 = vrcp.pop %v1516
    %v1518 = vmul.f32 %v1516, %v1517
    %v1519 = vsub.f32 1.0, %v1518
    %v1520 = vmul.f32 %v1517, %v1519
    %v1521 = vadd.f32 %v1517, %v1520
    %vm1522 = vweird.f32 %v1516
    %vm1523 = vweird.f32 %v1517
    %vm1524 = vmor %vm1522, %vm1523
    %v1525 = vsel %vm1524, %v1517, %v1521
    %v1526 = vand.u32 2147483647, %v1516
    %vm1527 = vcmp.eq.f32.partialorder %v1526, 8.507059e+37
    %v1528 = vand.u32 %v1516, 2147483648
    %v1529 = vor.u32 1.1754944e-38, %v1528
    %v1530 = vsel %vm1527, %v1529, %v1525
    %v1531 = vmul.f32 1.0, %v1530
    %v1532 = vtanh.pop %v1511
    %v1533 = vmul.f32 %v1531, %v1481
    %1535 = vrot.lane.b32.xlu0 %v1532, 116
    %v1536 = vpop.permute.xlu0 %1535
    %v1538 = vmul.f32 %v1531, %v1536
    %1540 = vrot.lane.b32.xlu0 %v1538, 4
    %v1541 = vpop.permute.xlu0 %1540
    %v1543 = vadd.f32 %v1533, %v1541
    %v1544 = vtanh.pop %v1543
    %1546 = vrot.lane.b32.xlu0 %v1544, 4
    %v1547 = vpop.permute.xlu0 %1546
    %v1549 = vmul.f32 %v1531, %v1547
    %1551 = vrot.lane.b32.xlu0 %v1549, 117
    %v1552 = vpop.permute.xlu0 %1551
    %1554 = vrot.lane.b32.xlu0 %v1425, 118
    %v1555 = vpop.permute.xlu0 %1554
    %1557 = vrot.lane.b32.xlu0 %v1301, 119
    %v1558 = vpop.permute.xlu0 %1557
    %vm1561 = vcmask 7168
    %v1562 = vsel %vm1561, %v1552, %v1555
    %vm1563 = vcmask 15360
    %v1564 = vsel %vm1563, %v1562, %v1558
    %vm1565 = vcmask 23552
    %v1566 = vsel %vm1565, %v1564, %v1177
    %vm1567 = vcmask 25600
    %1568 = vst.msk [vmem:[#allocation5] sm:$0x3] %vm1567, %v1566
    // Predicated region
    $region58: #{lstm_vae_forward.1} parent=1 // pred_check
      _
    $region59: #{lstm_vae_forward.1} parent=1 // pred_check_branch
      %1570 = sbr.rel (0) target = $region61
    $region60: #{lstm_vae_forward.1} parent=1 // pred_region
      %1572 = vsyncadd [#allocation4], 0
      %s1574 = sshll.u32 [#allocation5], 4
      %s1575 = int_to_ptr.vmem [resolvable:$true] %s1574
      %s1576 = sshll.u32 %s13, 4
      %s1577 = int_to_ptr.hbm [resolvable:$true] %s1576
      %1579 = dma.vmem_to_hbm [thread:$0]  %s1575, 32, %s1577, [#allocation4]
    $region61: #{lstm_vae_forward.1} parent=1 // pred_fallthru
      _
    // Predicated region
    $region62: #{lstm_vae_forward.1} parent=1 // pred_check
      _
    $region63: #{lstm_vae_forward.1} parent=1 // pred_check_branch
      %1581 = sbr.rel (0) target = $region65
    $region64: #{lstm_vae_forward.1} parent=1 // pred_region
      %1583 = dma.done [#allocation4], 32
    $region65: #{lstm_vae_forward.1} parent=1 // pred_fallthru
      _
    %1584 = vsyncpa [#allocation3], 1
    %1585 = vsyncpa [#allocation4], 1

</llo_original>
